<compile_context>
chip_gen: v7x
topology: tpu7x:2x2x1
jax: 0.10.0
libtpu: 0.0.40
codegen_flags: <defaults>
</compile_context>

<pallas_src>
import functools

import jax
import jax.numpy as jnp
import numpy as np
from jax.experimental import pallas as pl
from jax.experimental.pallas import tpu as pltpu

EPS = 1e-5


def _round_up(x, m):
    return (x + m - 1) // m * m


# ----------------------------------------------------------------------------
# Pallas kernel: fused 3x3 conv + BN (+ fused shortcut) + ReLU, implicit GEMM.
# One grid step = one image x one output-channel tile.
# ----------------------------------------------------------------------------
def _conv3x3_bn_kernel(*refs, stride, wph, relu, mode):
    """
    x_ref  : (s*s, 1, L, Cp_in)  bf16  padded, phase-decomposed, row-flattened
    w_ref  : (9, Cp_in, TN)      bf16  BN-scale-folded 3x3 weights (tap-major)
    b_ref  : (1, TN)             f32   BN bias (+ shortcut BN bias if 'proj')
    xs_ref : (1, M, Cp_x)        bf16  strided input of the 1x1 projection
    wsc_ref: (Cp_x, TN)          bf16  BN-scale-folded projection weight
    r_ref  : (1, M, TN)          f32   identity residual
    o_ref  : (1, M, TN)
    """
    if mode == "proj":
        x_ref, w_ref, b_ref, xs_ref, wsc_ref, o_ref = refs
    elif mode == "add":
        x_ref, w_ref, b_ref, r_ref, o_ref = refs
    else:
        x_ref, w_ref, b_ref, o_ref = refs

    m = o_ref.shape[1]
    tn = o_ref.shape[2]

    acc = jnp.zeros((m, tn), jnp.float32)
    # 9-tap implicit-GEMM accumulation: each tap is a row-shifted slice of the
    # flattened phase plane already resident in VMEM (no im2col in HBM).
    for dy in range(3):
        for dx in range(3):
            p = (dy % stride) * stride + (dx % stride)          # phase index
            off = (dy // stride) * wph + (dx // stride)         # row shift
            xt = x_ref[p, 0, pl.ds(off, m), :]                  # (M, Cp_in)
            acc = acc + jnp.dot(xt, w_ref[3 * dy + dx],
                                preferred_element_type=jnp.float32)

    if mode == "proj":
        # Projection shortcut fused as extra K columns of the same reduction.
        acc = acc + jnp.dot(xs_ref[0], wsc_ref[...],
                            preferred_element_type=jnp.float32)

    y = acc + b_ref[...]                                        # folded BN bias
    if mode == "add":
        y = y + r_ref[0]                                        # f32 residual
    if relu:
        y = jnp.maximum(y, 0.0)
    o_ref[...] = y.reshape(o_ref.shape).astype(o_ref.dtype)


# ----------------------------------------------------------------------------
# Wrapper-side data prep (one fused XLA pass over the activations per conv).
# ----------------------------------------------------------------------------
def _phase_rows(x_nhwc, stride, cp_in):
    """Zero-pad (halo + channels), phase-decompose for the stride, and flatten
    spatial rows so every 3x3 tap becomes a pure 1-D row shift."""
    n, h, w, c = x_nhwc.shape
    ho = (h - 1) // stride + 1
    wo = (w - 1) // stride + 1
    q = 2 // stride                       # per-phase halo (2 for s=1, 1 for s=2)
    hph, wph = ho + q, wo + q
    hp, wp = hph * stride, wph * stride

    xb = x_nhwc.astype(jnp.bfloat16)
    xb = jnp.pad(xb, ((0, 0), (1, hp - h - 1), (1, wp - w - 1), (0, cp_in - c)))
    xb = xb.reshape(n, hph, stride, wph, stride, cp_in)
    xb = jnp.transpose(xb, (2, 4, 0, 1, 3, 5))         # (s, s, n, hph, wph, c)
    xb = xb.reshape(stride * stride, n, hph * wph, cp_in)
    flat_len = _round_up(hph * wph + q, 8)             # room for last tap shift
    xb = jnp.pad(xb, ((0, 0), (0, 0), (0, flat_len - hph * wph), (0, 0)))
    return xb, ho, wo, wph


def _conv3x3_bn(x_nhwc, w_taps, bias, *, stride, relu, out_dtype,
                proj=None, residual=None):
    """Fused 3x3 conv + folded BN (+ optional fused shortcut) + optional ReLU.

    w_taps : (9, Cin, Cout) f32, BN scale already folded in.
    bias   : (Cout,) f32 (plus shortcut BN bias when `proj` is given).
    proj   : optional (xs (N, Ho, Wo, Cx) strided input, wsc (Cx, Cout) f32).
    residual: optional (N, Ho, Wo, Cout) f32 identity shortcut (stride == 1).
    Returns (N, Ho, Wo, Cout) in `out_dtype`.
    """
    n, h, w, cin = x_nhwc.shape
    cout = w_taps.shape[2]
    cp_in = _round_up(cin, 128)
    cp_out = _round_up(cout, 128)

    xph, ho, wo, wph = _phase_rows(x_nhwc, stride, cp_in)
    s2, _, flat_len, _ = xph.shape
    m = ho * wph                                   # rows per image (incl. halo cols)

    # Lane-dense output-channel tile; keep >= 2 grid steps for v7x's 2 cores.
    tn = 256 if cp_out % 256 == 0 else 128
    if n == 1 and cp_out > tn:
        tn = 128
    grid = (n, cp_out // tn)                       # j innermost: x reused across j

    wmat = jnp.pad(w_taps, ((0, 0), (0, cp_in - cin), (0, cp_out - cout)))
    wmat = wmat.astype(jnp.bfloat16)
    bvec = jnp.pad(bias.reshape(1, -1).astype(jnp.float32),
                   ((0, 0), (0, cp_out - cout)))

    inputs = [xph, wmat, bvec]
    in_specs = [
        pl.BlockSpec((s2, 1, flat_len, cp_in), lambda b, j: (0, b, 0, 0)),
        pl.BlockSpec((9, cp_in, tn), lambda b, j: (0, 0, j)),
        pl.BlockSpec((1, tn), lambda b, j: (0, j)),
    ]
    flops = 2 * n * m * (9 * cp_in) * cp_out
    out_isize = jnp.dtype(out_dtype).itemsize
    vmem_est = (2 * s2 * flat_len * cp_in * 2 + 2 * 9 * cp_in * tn * 2
                + 2 * tn * 4 + 2 * m * tn * out_isize
                + m * tn * 4 + 2 * m * cp_in * 2)

    if proj is not None:
        xs, wsc = proj
        cx = xs.shape[3]
        cpx = _round_up(cx, 128)
        xsb = jnp.pad(xs.astype(jnp.bfloat16),
                      ((0, 0), (0, 0), (0, wph - wo), (0, cpx - cx)))
        xsb = xsb.reshape(n, m, cpx)
        wscb = jnp.pad(wsc, ((0, cpx - cx), (0, cp_out - cout)))
        wscb = wscb.astype(jnp.bfloat16)
        inputs += [xsb, wscb]
        in_specs += [
            pl.BlockSpec((1, m, cpx), lambda b, j: (b, 0, 0)),
            pl.BlockSpec((cpx, tn), lambda b, j: (0, j)),
        ]
        flops += 2 * n * m * cpx * cp_out
        vmem_est += 2 * m * cpx * 2 + 2 * cpx * tn * 2
        mode = "proj"
    elif residual is not None:
        r = jnp.pad(residual.astype(jnp.float32),
                    ((0, 0), (0, 0), (0, wph - wo), (0, cp_out - cout)))
        r = r.reshape(n, m, cp_out)
        inputs.append(r)
        in_specs.append(pl.BlockSpec((1, m, tn), lambda b, j: (b, 0, j)))
        vmem_est += 2 * m * tn * 4
        mode = "add"
    else:
        mode = "none"

    kernel = functools.partial(_conv3x3_bn_kernel, stride=stride, wph=wph,
                               relu=relu, mode=mode)

    bytes_accessed = sum(int(np.prod(a.shape)) * a.dtype.itemsize
                         for a in inputs)
    bytes_accessed += n * m * cp_out * out_isize
    # Generation-safe VMEM budget (v7x has only 64 MiB physical per core).
    vmem_limit = int(min(max(2 * vmem_est, 32 * 1024 * 1024),
                         64 * 1024 * 1024))

    out = pl.pallas_call(
        kernel,
        out_shape=jax.ShapeDtypeStruct((n, m, cp_out), out_dtype),
        grid=grid,
        in_specs=in_specs,
        out_specs=pl.BlockSpec((1, m, tn), lambda b, j: (b, 0, j)),
        compiler_params=pltpu.CompilerParams(
            dimension_semantics=("parallel", "parallel"),
            vmem_limit_bytes=vmem_limit),
        cost_estimate=pl.CostEstimate(flops=flops, transcendentals=0,
                                      bytes_accessed=bytes_accessed),
    )(*inputs)

    out = out.reshape(n, ho, wph, cp_out)
    return out[:, :, :wo, :cout]


# ----------------------------------------------------------------------------
# Glue: BN folding, weight layout (plain JAX).
# ----------------------------------------------------------------------------
def _fold_bn(gamma, beta, mean, var):
    scale = gamma / jnp.sqrt(var + EPS)
    return scale, beta - mean * scale


def _w3x3_taps(w_oihw):
    # OIHW -> (kh, kw, in, out) -> (9, in, out); tap index = 3*dy + dx.
    o, i, kh, kw = w_oihw.shape
    return jnp.transpose(w_oihw, (2, 3, 1, 0)).reshape(kh * kw, i, o)


# ----------------------------------------------------------------------------
# BasicBlock forward (NCHW in / NCHW out, matching the PyTorch module).
# ----------------------------------------------------------------------------
def basic_block_forward(x_nchw, params, stride):
    x = jnp.transpose(x_nchw, (0, 2, 3, 1)).astype(jnp.float32)   # NHWC
    n, h, w, cin = x.shape
    cout = params["conv1_w"].shape[0]

    # conv1(3x3, stride) + BN1 + ReLU   (bf16 intermediate)
    s1, b1 = _fold_bn(params["bn1_gamma"], params["bn1_beta"],
                      params["bn1_mean"], params["bn1_var"])
    w1 = _w3x3_taps(params["conv1_w"]) * s1            # BN scale folded into W
    h1 = _conv3x3_bn(x, w1, b1, stride=stride, relu=True,
                     out_dtype=jnp.bfloat16)

    # conv2(3x3, stride 1) + BN2, shortcut fused, final ReLU
    s2, b2 = _fold_bn(params["bn2_gamma"], params["bn2_beta"],
                      params["bn2_mean"], params["bn2_var"])
    w2 = _w3x3_taps(params["conv2_w"]) * s2

    if stride != 1 or cin != cout:
        ssc, bsc = _fold_bn(params["bnsc_gamma"], params["bnsc_beta"],
                            params["bnsc_mean"], params["bnsc_var"])
        wsc = params["convsc_w"][:, :, 0, 0].T * ssc    # (Cin, Cout), BN folded
        xs = x[:, ::stride, ::stride, :]                # 1x1-conv strided input
        out = _conv3x3_bn(h1, w2, b2 + bsc, stride=1, relu=True,
                          out_dtype=jnp.float32, proj=(xs, wsc))
    else:
        out = _conv3x3_bn(h1, w2, b2, stride=1, relu=True,
                          out_dtype=jnp.float32, residual=x)   # f32 residual
    # NCHW is the module contract; drop this transpose if the consumer is NHWC.
    return jnp.transpose(out, (0, 3, 1, 2))


# ----------------------------------------------------------------------------
# Pure-JAX reference (f32, for correctness check).
# ----------------------------------------------------------------------------
def _ref_forward(x, params, stride):
    def conv(x, w, s, pad):
        return jax.lax.conv_general_dilated(
            x, w, (s, s), [(pad, pad), (pad, pad)],
            dimension_numbers=("NCHW", "OIHW", "NCHW"))

    def bn(x, g, b, m, v):
        sc = g / jnp.sqrt(v + EPS)
        return x * sc[None, :, None, None] + (b - m * sc)[None, :, None, None]

    y = conv(x, params["conv1_w"], stride, 1)
    y = jnp.maximum(bn(y, params["bn1_gamma"], params["bn1_beta"],
                       params["bn1_mean"], params["bn1_var"]), 0.0)
    y = conv(y, params["conv2_w"], 1, 1)
    y = bn(y, params["bn2_gamma"], params["bn2_beta"],
           params["bn2_mean"], params["bn2_var"])
    c_in, c_out = x.shape[1], params["conv1_w"].shape[0]
    if stride != 1 or c_in != c_out:
        sc = conv(x, params["convsc_w"], stride, 0)
        sc = bn(sc, params["bnsc_gamma"], params["bnsc_beta"],
                params["bnsc_mean"], params["bnsc_var"])
    else:
        sc = x
    return jnp.maximum(y + sc, 0.0)


def _init_params(key, c_in, c_out, stride):
    ks = jax.random.split(key, 8)
    p = {
        "conv1_w": jax.random.normal(ks[0], (c_out, c_in, 3, 3), jnp.float32) * 0.1,
        "bn1_gamma": jax.random.uniform(ks[1], (c_out,), jnp.float32, 0.5, 1.5),
        "bn1_beta": jax.random.normal(ks[2], (c_out,), jnp.float32) * 0.1,
        "bn1_mean": jax.random.normal(ks[3], (c_out,), jnp.float32) * 0.1,
        "bn1_var": jax.random.uniform(ks[4], (c_out,), jnp.float32, 0.5, 1.5),
        "conv2_w": jax.random.normal(ks[5], (c_out, c_out, 3, 3), jnp.float32) * 0.1,
        "bn2_gamma": jnp.ones((c_out,), jnp.float32),
        "bn2_beta": jnp.zeros((c_out,), jnp.float32),
        "bn2_mean": jnp.zeros((c_out,), jnp.float32),
        "bn2_var": jnp.ones((c_out,), jnp.float32),
    }
    if stride != 1 or c_in != c_out:
        p["convsc_w"] = jax.random.normal(ks[6], (c_out, c_in, 1, 1), jnp.float32) * 0.1
        p["bnsc_gamma"] = jax.random.uniform(ks[7], (c_out,), jnp.float32, 0.5, 1.5)
        p["bnsc_beta"] = jnp.zeros((c_out,), jnp.float32)
        p["bnsc_mean"] = jnp.zeros((c_out,), jnp.float32)
        p["bnsc_var"] = jnp.ones((c_out,), jnp.float32)
    return p


if __name__ == "__main__":
    key = jax.random.PRNGKey(0)
    k_x, k_p, k_x2, k_p2 = jax.random.split(key, 4)

    # Path 1: projection shortcut (stride 2, Cin != Cout).
    batch, c_in, c_out, hw, stride = 2, 4, 8, 16, 2
    x = jax.random.normal(k_x, (batch, c_in, hw, hw), jnp.float32)
    params = _init_params(k_p, c_in, c_out, stride)
    out = jax.block_until_ready(basic_block_forward(x, params, stride))
    ref = jax.block_until_ready(_ref_forward(x, params, stride))
    assert out.shape == (batch, c_out, hw // stride, hw // stride), out.shape
    # bf16 MXU operands + bf16 h1 intermediate vs. an all-f32 XLA reference.
    np.testing.assert_allclose(np.asarray(out), np.asarray(ref),
                               rtol=5e-2, atol=5e-2)

    # Path 2: identity shortcut (stride 1, Cin == Cout), f32 residual add.
    x2 = jax.random.normal(k_x2, (batch, c_out, hw, hw), jnp.float32)
    params2 = _init_params(k_p2, c_out, c_out, 1)
    out2 = jax.block_until_ready(basic_block_forward(x2, params2, 1))
    ref2 = jax.block_until_ready(_ref_forward(x2, params2, 1))
    assert out2.shape == (batch, c_out, hw, hw), out2.shape
    np.testing.assert_allclose(np.asarray(out2), np.asarray(ref2),
                               rtol=5e-2, atol=5e-2)

    print("KERNEL_OK")
</pallas_src>

<mosaic_0001>
module attributes {stable_mosaic.version = 11 : i64} {
  func.func @_conv3x3_bn_kernel(%arg0: i32, %arg1: i32, %arg2: memref<4x1x88x128xbf16, #tpu.memory_space<vmem>>, %arg3: memref<9x128x128xbf16, #tpu.memory_space<vmem>>, %arg4: memref<1x128xf32, #tpu.memory_space<vmem>>, %arg5: memref<1x72x128xbf16, #tpu.memory_space<vmem>>) attributes {dimension_semantics = [#tpu.dimension_semantics<parallel>, #tpu.dimension_semantics<parallel>], iteration_bounds = array<i64: 2, 1>, scalar_prefetch = 0 : i64, scratch_operands = 0 : i64, tpu.core_type = #tpu.core_type<tc>, window_params = [{transform_indices = @transform_0, window_bounds = array<i64: 4, 1, 88, 128>}, {transform_indices = @transform_1, window_bounds = array<i64: 9, 128, 128>}, {transform_indices = @transform_2, window_bounds = array<i64: 1, 128>}, {transform_indices = @transform_3, window_bounds = array<i64: 1, 72, 128>}]} {
    %cst = arith.constant 0.000000e+00 : f32
    %0 = vector.broadcast %cst : f32 to vector<72x128xf32>
    %c0 = arith.constant 0 : index
    %c0_0 = arith.constant 0 : index
    %c0_1 = arith.constant 0 : index
    %c0_2 = arith.constant 0 : index
    %1 = vector.load %arg2[%c0, %c0_0, %c0_1, %c0_2] : memref<4x1x88x128xbf16, #tpu.memory_space<vmem>>, vector<1x1x72x128xbf16>
    %2 = vector.shape_cast %1 : vector<1x1x72x128xbf16> to vector<72x128xbf16>
    %c0_3 = arith.constant 0 : index
    %c0_4 = arith.constant 0 : index
    %c0_5 = arith.constant 0 : index
    %3 = vector.load %arg3[%c0_3, %c0_4, %c0_5] : memref<9x128x128xbf16, #tpu.memory_space<vmem>>, vector<1x128x128xbf16>
    %4 = vector.shape_cast %3 : vector<1x128x128xbf16> to vector<128x128xbf16>
    %cst_6 = arith.constant dense<0.000000e+00> : vector<72x128xf32>
    %5 = tpu.matmul %2, %4, %cst_6 {dimension_numbers = #tpu.dot_dimension_numbers<[1], [0], [0], [1], [0, 0, 1, 1], [], []>} : vector<72x128xbf16>, vector<128x128xbf16>, vector<72x128xf32> -> vector<72x128xf32>
    %6 = arith.addf %0, %5 : vector<72x128xf32>
    %c1 = arith.constant 1 : index
    %c0_7 = arith.constant 0 : index
    %c0_8 = arith.constant 0 : index
    %c0_9 = arith.constant 0 : index
    %7 = vector.load %arg2[%c1, %c0_7, %c0_8, %c0_9] : memref<4x1x88x128xbf16, #tpu.memory_space<vmem>>, vector<1x1x72x128xbf16>
    %8 = vector.shape_cast %7 : vector<1x1x72x128xbf16> to vector<72x128xbf16>
    %c1_10 = arith.constant 1 : index
    %c0_11 = arith.constant 0 : index
    %c0_12 = arith.constant 0 : index
    %9 = vector.load %arg3[%c1_10, %c0_11, %c0_12] : memref<9x128x128xbf16, #tpu.memory_space<vmem>>, vector<1x128x128xbf16>
    %10 = vector.shape_cast %9 : vector<1x128x128xbf16> to vector<128x128xbf16>
    %cst_13 = arith.constant dense<0.000000e+00> : vector<72x128xf32>
    %11 = tpu.matmul %8, %10, %cst_13 {dimension_numbers = #tpu.dot_dimension_numbers<[1], [0], [0], [1], [0, 0, 1, 1], [], []>} : vector<72x128xbf16>, vector<128x128xbf16>, vector<72x128xf32> -> vector<72x128xf32>
    %12 = arith.addf %6, %11 : vector<72x128xf32>
    %c0_14 = arith.constant 0 : index
    %c0_15 = arith.constant 0 : index
    %c1_16 = arith.constant 1 : index
    %c0_17 = arith.constant 0 : index
    %13 = vector.load %arg2[%c0_14, %c0_15, %c1_16, %c0_17] : memref<4x1x88x128xbf16, #tpu.memory_space<vmem>>, vector<1x1x72x128xbf16>
    %14 = vector.shape_cast %13 : vector<1x1x72x128xbf16> to vector<72x128xbf16>
    %c2 = arith.constant 2 : index
    %c0_18 = arith.constant 0 : index
    %c0_19 = arith.constant 0 : index
    %15 = vector.load %arg3[%c2, %c0_18, %c0_19] : memref<9x128x128xbf16, #tpu.memory_space<vmem>>, vector<1x128x128xbf16>
    %16 = vector.shape_cast %15 : vector<1x128x128xbf16> to vector<128x128xbf16>
    %cst_20 = arith.constant dense<0.000000e+00> : vector<72x128xf32>
    %17 = tpu.matmul %14, %16, %cst_20 {dimension_numbers = #tpu.dot_dimension_numbers<[1], [0], [0], [1], [0, 0, 1, 1], [], []>} : vector<72x128xbf16>, vector<128x128xbf16>, vector<72x128xf32> -> vector<72x128xf32>
    %18 = arith.addf %12, %17 : vector<72x128xf32>
    %c2_21 = arith.constant 2 : index
    %c0_22 = arith.constant 0 : index
    %c0_23 = arith.constant 0 : index
    %c0_24 = arith.constant 0 : index
    %19 = vector.load %arg2[%c2_21, %c0_22, %c0_23, %c0_24] : memref<4x1x88x128xbf16, #tpu.memory_space<vmem>>, vector<1x1x72x128xbf16>
    %20 = vector.shape_cast %19 : vector<1x1x72x128xbf16> to vector<72x128xbf16>
    %c3 = arith.constant 3 : index
    %c0_25 = arith.constant 0 : index
    %c0_26 = arith.constant 0 : index
    %21 = vector.load %arg3[%c3, %c0_25, %c0_26] : memref<9x128x128xbf16, #tpu.memory_space<vmem>>, vector<1x128x128xbf16>
    %22 = vector.shape_cast %21 : vector<1x128x128xbf16> to vector<128x128xbf16>
    %cst_27 = arith.constant dense<0.000000e+00> : vector<72x128xf32>
    %23 = tpu.matmul %20, %22, %cst_27 {dimension_numbers = #tpu.dot_dimension_numbers<[1], [0], [0], [1], [0, 0, 1, 1], [], []>} : vector<72x128xbf16>, vector<128x128xbf16>, vector<72x128xf32> -> vector<72x128xf32>
    %24 = arith.addf %18, %23 : vector<72x128xf32>
    %c3_28 = arith.constant 3 : index
    %c0_29 = arith.constant 0 : index
    %c0_30 = arith.constant 0 : index
    %c0_31 = arith.constant 0 : index
    %25 = vector.load %arg2[%c3_28, %c0_29, %c0_30, %c0_31] : memref<4x1x88x128xbf16, #tpu.memory_space<vmem>>, vector<1x1x72x128xbf16>
    %26 = vector.shape_cast %25 : vector<1x1x72x128xbf16> to vector<72x128xbf16>
    %c4 = arith.constant 4 : index
    %c0_32 = arith.constant 0 : index
    %c0_33 = arith.constant 0 : index
    %27 = vector.load %arg3[%c4, %c0_32, %c0_33] : memref<9x128x128xbf16, #tpu.memory_space<vmem>>, vector<1x128x128xbf16>
    %28 = vector.shape_cast %27 : vector<1x128x128xbf16> to vector<128x128xbf16>
    %cst_34 = arith.constant dense<0.000000e+00> : vector<72x128xf32>
    %29 = tpu.matmul %26, %28, %cst_34 {dimension_numbers = #tpu.dot_dimension_numbers<[1], [0], [0], [1], [0, 0, 1, 1], [], []>} : vector<72x128xbf16>, vector<128x128xbf16>, vector<72x128xf32> -> vector<72x128xf32>
    %30 = arith.addf %24, %29 : vector<72x128xf32>
    %c2_35 = arith.constant 2 : index
    %c0_36 = arith.constant 0 : index
    %c1_37 = arith.constant 1 : index
    %c0_38 = arith.constant 0 : index
    %31 = vector.load %arg2[%c2_35, %c0_36, %c1_37, %c0_38] : memref<4x1x88x128xbf16, #tpu.memory_space<vmem>>, vector<1x1x72x128xbf16>
    %32 = vector.shape_cast %31 : vector<1x1x72x128xbf16> to vector<72x128xbf16>
    %c5 = arith.constant 5 : index
    %c0_39 = arith.constant 0 : index
    %c0_40 = arith.constant 0 : index
    %33 = vector.load %arg3[%c5, %c0_39, %c0_40] : memref<9x128x128xbf16, #tpu.memory_space<vmem>>, vector<1x128x128xbf16>
    %34 = vector.shape_cast %33 : vector<1x128x128xbf16> to vector<128x128xbf16>
    %cst_41 = arith.constant dense<0.000000e+00> : vector<72x128xf32>
    %35 = tpu.matmul %32, %34, %cst_41 {dimension_numbers = #tpu.dot_dimension_numbers<[1], [0], [0], [1], [0, 0, 1, 1], [], []>} : vector<72x128xbf16>, vector<128x128xbf16>, vector<72x128xf32> -> vector<72x128xf32>
    %36 = arith.addf %30, %35 : vector<72x128xf32>
    %c0_42 = arith.constant 0 : index
    %c0_43 = arith.constant 0 : index
    %c9 = arith.constant 9 : index
    %c0_44 = arith.constant 0 : index
    %37 = vector.load %arg2[%c0_42, %c0_43, %c9, %c0_44] : memref<4x1x88x128xbf16, #tpu.memory_space<vmem>>, vector<1x1x72x128xbf16>
    %38 = vector.shape_cast %37 : vector<1x1x72x128xbf16> to vector<72x128xbf16>
    %c6 = arith.constant 6 : index
    %c0_45 = arith.constant 0 : index
    %c0_46 = arith.constant 0 : index
    %39 = vector.load %arg3[%c6, %c0_45, %c0_46] : memref<9x128x128xbf16, #tpu.memory_space<vmem>>, vector<1x128x128xbf16>
    %40 = vector.shape_cast %39 : vector<1x128x128xbf16> to vector<128x128xbf16>
    %cst_47 = arith.constant dense<0.000000e+00> : vector<72x128xf32>
    %41 = tpu.matmul %38, %40, %cst_47 {dimension_numbers = #tpu.dot_dimension_numbers<[1], [0], [0], [1], [0, 0, 1, 1], [], []>} : vector<72x128xbf16>, vector<128x128xbf16>, vector<72x128xf32> -> vector<72x128xf32>
    %42 = arith.addf %36, %41 : vector<72x128xf32>
    %c1_48 = arith.constant 1 : index
    %c0_49 = arith.constant 0 : index
    %c9_50 = arith.constant 9 : index
    %c0_51 = arith.constant 0 : index
    %43 = vector.load %arg2[%c1_48, %c0_49, %c9_50, %c0_51] : memref<4x1x88x128xbf16, #tpu.memory_space<vmem>>, vector<1x1x72x128xbf16>
    %44 = vector.shape_cast %43 : vector<1x1x72x128xbf16> to vector<72x128xbf16>
    %c7 = arith.constant 7 : index
    %c0_52 = arith.constant 0 : index
    %c0_53 = arith.constant 0 : index
    %45 = vector.load %arg3[%c7, %c0_52, %c0_53] : memref<9x128x128xbf16, #tpu.memory_space<vmem>>, vector<1x128x128xbf16>
    %46 = vector.shape_cast %45 : vector<1x128x128xbf16> to vector<128x128xbf16>
    %cst_54 = arith.constant dense<0.000000e+00> : vector<72x128xf32>
    %47 = tpu.matmul %44, %46, %cst_54 {dimension_numbers = #tpu.dot_dimension_numbers<[1], [0], [0], [1], [0, 0, 1, 1], [], []>} : vector<72x128xbf16>, vector<128x128xbf16>, vector<72x128xf32> -> vector<72x128xf32>
    %48 = arith.addf %42, %47 : vector<72x128xf32>
    %c0_55 = arith.constant 0 : index
    %c0_56 = arith.constant 0 : index
    %c10 = arith.constant 10 : index
    %c0_57 = arith.constant 0 : index
    %49 = vector.load %arg2[%c0_55, %c0_56, %c10, %c0_57] : memref<4x1x88x128xbf16, #tpu.memory_space<vmem>>, vector<1x1x72x128xbf16>
    %50 = vector.shape_cast %49 : vector<1x1x72x128xbf16> to vector<72x128xbf16>
    %c8 = arith.constant 8 : index
    %c0_58 = arith.constant 0 : index
    %c0_59 = arith.constant 0 : index
    %51 = vector.load %arg3[%c8, %c0_58, %c0_59] : memref<9x128x128xbf16, #tpu.memory_space<vmem>>, vector<1x128x128xbf16>
    %52 = vector.shape_cast %51 : vector<1x128x128xbf16> to vector<128x128xbf16>
    %cst_60 = arith.constant dense<0.000000e+00> : vector<72x128xf32>
    %53 = tpu.matmul %50, %52, %cst_60 {dimension_numbers = #tpu.dot_dimension_numbers<[1], [0], [0], [1], [0, 0, 1, 1], [], []>} : vector<72x128xbf16>, vector<128x128xbf16>, vector<72x128xf32> -> vector<72x128xf32>
    %54 = arith.addf %48, %53 : vector<72x128xf32>
    %c0_61 = arith.constant 0 : index
    %c0_62 = arith.constant 0 : index
    %55 = vector.load %arg4[%c0_61, %c0_62] : memref<1x128xf32, #tpu.memory_space<vmem>>, vector<1x128xf32>
    %56 = vector.broadcast %55 : vector<1x128xf32> to vector<72x128xf32>
    %57 = arith.addf %54, %56 : vector<72x128xf32>
    %cst_63 = arith.constant 0.000000e+00 : f32
    %58 = vector.broadcast %cst_63 : f32 to vector<72x128xf32>
    %59 = arith.maximumf %57, %58 : vector<72x128xf32>
    %60 = vector.shape_cast %59 : vector<72x128xf32> to vector<1x72x128xf32>
    %61 = arith.truncf %60 : vector<1x72x128xf32> to vector<1x72x128xbf16>
    %c0_64 = arith.constant 0 : index
    %c0_65 = arith.constant 0 : index
    %c0_66 = arith.constant 0 : index
    %62 = vector.load %arg5[%c0_64, %c0_65, %c0_66] : memref<1x72x128xbf16, #tpu.memory_space<vmem>>, vector<1x72x128xbf16>
    tpu.vector_store %arg5[%c0_64, %c0_65, %c0_66], %61 {strides = array<i32>} : memref<1x72x128xbf16, #tpu.memory_space<vmem>>, vector<1x72x128xbf16>,
    return
  }
  func.func @transform_0(%arg0: i32, %arg1: i32) -> (i32, i32, i32, i32) {
    %c0_i32 = arith.constant 0 : i32
    %c0_i32_0 = arith.constant 0 : i32
    %c0_i32_1 = arith.constant 0 : i32
    %c0_i32_2 = arith.constant 0 : i32
    return %c0_i32, %arg0, %c0_i32_0, %c0_i32_1 : i32, i32, i32, i32
  }
  func.func @transform_1(%arg0: i32, %arg1: i32) -> (i32, i32, i32) {
    %c0_i32 = arith.constant 0 : i32
    %c0_i32_0 = arith.constant 0 : i32
    %c0_i32_1 = arith.constant 0 : i32
    return %c0_i32, %c0_i32_0, %arg1 : i32, i32, i32
  }
  func.func @transform_2(%arg0: i32, %arg1: i32) -> (i32, i32) {
    %c0_i32 = arith.constant 0 : i32
    %c0_i32_0 = arith.constant 0 : i32
    return %c0_i32, %arg1 : i32, i32
  }
  func.func @transform_3(%arg0: i32, %arg1: i32) -> (i32, i32, i32) {
    %c0_i32 = arith.constant 0 : i32
    %c0_i32_0 = arith.constant 0 : i32
    return %arg0, %c0_i32, %arg1 : i32, i32, i32
  }
}

</mosaic_0001>

<llo_original>
// kernel: tpu_custom_call.1
$region0: #{tpu_custom_call.1}
  #allocation0 [shape = 'u32[]', space=smem, size = 0x4, offset = 0x4, fixed_abs, tag = 'smem constant byte address 0x4 - core index']
  #allocation1 [shape = 'u32[144,128]{1,0:T(1,128)}', space=vmem, size = 0x12000, scoped, tag = 'internal scratch']
  #allocation8 [shape = 's32[]', space=sflag, size = 0x4, offset = 0, fixed_abs, tag = 'sflag constant byte address 0x0 - dummy sync flag']
  %s0 = inlined_call_operand.hbm [shape: bf16[4,2,88,128], index: 0, kind: input, shape index: {}]
  %s1 = inlined_call_operand.hbm [shape: bf16[9,128,128], index: 1, kind: input, shape index: {}]
  %s2 = inlined_call_operand.vmem [shape: f32[1,128], index: 2, kind: input, shape index: {}]
  %s3 = inlined_call_operand.hbm [shape: bf16[2,72,128], index: 3, kind: output, shape index: {}]
  %s4 = sld [smem:[#allocation0]]
  $region53: #{tpu_custom_call.1} parent=0
    _
  %s6 = ssub.s32 1, %s4
  %s7 = scalar_select 0, %s6, %s4
  $region1: #{tpu_custom_call.1} parent=0
    #allocation2 [shape = 'u8[180224]{0}', space=vmem, size = 0x2c000, scoped, tag = 'input window, operand 0']
    #allocation3 [shape = 's32[2]{0}', space=sflag, size = 0x8, scoped, tag = 'scoped memory for tpu_custom_call.1']
    #allocation4 [shape = 's32[2]{0}', space=sflag, size = 0x8, scoped, tag = 'scoped memory for tpu_custom_call.1']
    #allocation5 [shape = 'u8[294912]{0}', space=vmem, size = 0x48000, scoped, tag = 'input window, operand 1, single buffered']
    #allocation6 [shape = 's32[1]{0}', space=sflag, size = 0x4, scoped, tag = 'scoped memory for tpu_custom_call.1']
    #allocation7 [shape = 'u8[36864]{0}', space=vmem, size = 0x9000, scoped, tag = 'output window, operand 0']
    %8 = vsyncpa [#allocation3], 0
    %s9 = scalar_lea.sflag [#allocation3], 1
    %10 = vsyncpa %s9, 0
    %11 = vsyncpa [#allocation6], 0
    %12 = vsyncpa [#allocation4], 0
    %s13 = scalar_lea.sflag [#allocation4], 1
    %14 = vsyncpa %s13, 0
    loop: start=0, step=1, limit=4
    $region2: #{tpu_custom_call.1} parent=1 // loop_pre_header
      _
    $region3: #{tpu_custom_call.1} parent=1 // loop_header
      %s16 = sphi 0, %s20
      %p17 = scmp.ge.s32.totalorder %s16, 4
      %s23 = sphi 0, %s35
      %s24 = sphi 0, %s31
      %s25 = sphi 0, %s23
      %s26 = sphi 0, %s24
      %s27 = sphi 0, %s25
      %s28 = sphi 0, %s26
      %s38 = sphi 0, %s40
      %s41 = sphi 0, %s38
      %s42 = sphi 0, %s41
      %s58 = sphi 0, %s42
      %s64 = sphi 0, %s66
      %s67 = sphi 0, %s64
      %s68 = sphi 0, %s67
      %s84 = sphi 0, %s68
      %s90 = sphi 0, %s92
      %s93 = sphi 0, %s90
      %s94 = sphi 0, %s93
      %s110 = sphi 0, %s94
      %s118 = sphi 0, %s120
      %s121 = sphi 0, %s118
      %s122 = sphi 0, %s121
      %s138 = sphi 0, %s122
    $region4: #{tpu_custom_call.1} parent=1 // loop_header_branch
      %19 = sbr.rel (%p17) target = $region8
    $region5: #{tpu_custom_call.1} parent=1 // loop_body
      %s21 = ssub.s32 %s16, 1
      %s22 = ssub.s32 %s16, 2
      %s29 = sadd.s32 1, %s24
      %p30 = scmp.ge.s32.totalorder %s29, 1
      %s31 = scalar_select %p30, 0, %s29
      %s32 = sadd.s32 1, %s23
      %s33 = scalar_select %p30, %s32, %s23
      %p34 = scmp.ge.s32.totalorder %s33, 2
      %s35 = scalar_select %p34, 0, %s33
      %s36 = ssub.s32 %s23, %s35
      %p37 = scmp.eq.s32.totalorder %s36, 0
      %s39 = sadd.s32 %s38, 1
      %s40 = scalar_select %p37, %s38, %s39
      %p43 = pneg %p37
      %p44 = scmp.eq.s32.totalorder %s16, 1
      %p45 = por %p43, %p44
      %p46 = scmp.ne.s32.totalorder %s38, %s41
      %p47 = scmp.eq.s32.totalorder %s16, 0
      %p48 = por %p46, %p47
      %p49 = scmp.ne.s32.totalorder %s38, %s41
      %p50 = scmp.eq.s32.totalorder %s21, 1
      %p51 = por %p49, %p50
      %p52 = scmp.ne.s32.totalorder %s41, %s42
      %p53 = scmp.eq.s32.totalorder %s21, 0
      %p54 = por %p52, %p53
      %p55 = scmp.ne.s32.totalorder %s41, %s42
      %p56 = scmp.eq.s32.totalorder %s22, 1
      %p57 = por %p55, %p56
      %p59 = scmp.ne.s32.totalorder %s42, %s58
      %p60 = scmp.eq.s32.totalorder %s22, 0
      %p61 = por %p59, %p60
      %s62 = ssub.s32 %s24, %s31
      %p63 = scmp.eq.s32.totalorder %s62, 0
      %s65 = sadd.s32 %s64, 1
      %s66 = scalar_select %p63, %s64, %s65
      %p69 = pneg %p63
      %p70 = scmp.eq.s32.totalorder %s16, 1
      %p71 = por %p69, %p70
      %p72 = scmp.ne.s32.totalorder %s64, %s67
      %p73 = scmp.eq.s32.totalorder %s16, 0
      %p74 = por %p72, %p73
      %p75 = scmp.ne.s32.totalorder %s64, %s67
      %p76 = scmp.eq.s32.totalorder %s21, 1
      %p77 = por %p75, %p76
      %p78 = scmp.ne.s32.totalorder %s67, %s68
      %p79 = scmp.eq.s32.totalorder %s21, 0
      %p80 = por %p78, %p79
      %p81 = scmp.ne.s32.totalorder %s67, %s68
      %p82 = scmp.eq.s32.totalorder %s22, 1
      %p83 = por %p81, %p82
      %p85 = scmp.ne.s32.totalorder %s68, %s84
      %p86 = scmp.eq.s32.totalorder %s22, 0
      %p87 = por %p85, %p86
      %s88 = ssub.s32 %s24, %s31
      %p89 = scmp.eq.s32.totalorder %s88, 0
      %s91 = sadd.s32 %s90, 1
      %s92 = scalar_select %p89, %s90, %s91
      %p95 = pneg %p89
      %p96 = scmp.eq.s32.totalorder %s16, 1
      %p97 = por %p95, %p96
      %p98 = scmp.ne.s32.totalorder %s90, %s93
      %p99 = scmp.eq.s32.totalorder %s16, 0
      %p100 = por %p98, %p99
      %p101 = scmp.ne.s32.totalorder %s90, %s93
      %p102 = scmp.eq.s32.totalorder %s21, 1
      %p103 = por %p101, %p102
      %p104 = scmp.ne.s32.totalorder %s93, %s94
      %p105 = scmp.eq.s32.totalorder %s21, 0
      %p106 = por %p104, %p105
      %p107 = scmp.ne.s32.totalorder %s93, %s94
      %p108 = scmp.eq.s32.totalorder %s22, 1
      %p109 = por %p107, %p108
      %p111 = scmp.ne.s32.totalorder %s94, %s110
      %p112 = scmp.eq.s32.totalorder %s22, 0
      %p113 = por %p111, %p112
      %s114 = ssub.s32 %s23, %s35
      %s115 = ssub.s32 %s24, %s31
      %s116 = sor.u32 %s114, %s115
      %p117 = scmp.eq.s32.totalorder %s116, 0
      %s119 = sadd.s32 %s118, 1
      %s120 = scalar_select %p117, %s118, %s119
      %p123 = pneg %p117
      %p124 = scmp.eq.s32.totalorder %s16, 1
      %p125 = por %p123, %p124
      %p126 = scmp.ne.s32.totalorder %s118, %s121
      %p127 = scmp.eq.s32.totalorder %s16, 0
      %p128 = por %p126, %p127
      %p129 = scmp.ne.s32.totalorder %s118, %s121
      %p130 = scmp.eq.s32.totalorder %s21, 1
      %p131 = por %p129, %p130
      %p132 = scmp.ne.s32.totalorder %s121, %s122
      %p133 = scmp.eq.s32.totalorder %s21, 0
      %p134 = por %p132, %p133
      %p135 = scmp.ne.s32.totalorder %s121, %s122
      %p136 = scmp.eq.s32.totalorder %s22, 1
      %p137 = por %p135, %p136
      %p139 = scmp.ne.s32.totalorder %s122, %s138
      %p140 = scmp.eq.s32.totalorder %s22, 0
      %p141 = por %p139, %p140
      %p142 = scmp.le.s32.totalorder 1, %s16
      %p143 = scmp.lt.s32.totalorder %s16, 3
      %p144 = pnand %p142, %p143
      %p145 = pneg %p144
      // Predicated region
      $region9: #{tpu_custom_call.1} parent=5 // pred_check
        _
      $region10: #{tpu_custom_call.1} parent=5 // pred_check_branch
        %147 = sbr.rel (%p144) target = $region12
      $region11: #{tpu_custom_call.1} parent=5 // pred_region
        %s148 = ssub.s32 %s16, 1
        // Predicated region
        $region13: #{tpu_custom_call.1} parent=11 // pred_check
          %p149 = pneg %p80
        $region14: #{tpu_custom_call.1} parent=11 // pred_check_branch
          %151 = sbr.rel (%p149) target = $region16
        $region15: #{tpu_custom_call.1} parent=11 // pred_region
          %s153 = ssub.s32 9216, 9216
          %154 = vsyncadd [#allocation6], %s153
          %s155 = smul.addr %s26, 64
          %s156 = scalar_lea.hbm %s1, %s155
          %s157 = sshll.u32 [#allocation5], 4
          %s158 = int_to_ptr.vmem [resolvable:$true] %s157
          %163 = dma.hbm_to_vmem [thread:$0]  %s156, 9216, %s158, [#allocation6], 64, 64, 4
        $region16: #{tpu_custom_call.1} parent=11 // pred_fallthru
          _
        // Predicated region
        $region17: #{tpu_custom_call.1} parent=11 // pred_check
          %p164 = pneg %p106
        $region18: #{tpu_custom_call.1} parent=11 // pred_check_branch
          %166 = sbr.rel (%p164) target = $region20
        $region19: #{tpu_custom_call.1} parent=11 // pred_region
          %p167 = scmp.lt.s32.totalorder %s26, 0
          %s168 = scalar_select %p167, %s26, 0
          %s169 = scalar_lea.vmem %s2, %s168
        $region20: #{tpu_custom_call.1} parent=11 // pred_fallthru
          _
      $region12: #{tpu_custom_call.1} parent=5 // pred_fallthru
        _
      %p170 = scmp.lt.s32.totalorder %s16, 2
      // Predicated region
      $region21: #{tpu_custom_call.1} parent=5 // pred_check
        %p171 = pneg %p170
      $region22: #{tpu_custom_call.1} parent=5 // pred_check_branch
        %173 = sbr.rel (%p171) target = $region24
      $region23: #{tpu_custom_call.1} parent=5 // pred_region
        // Predicated region
        $region25: #{tpu_custom_call.1} parent=23 // pred_check
          %p174 = pneg %p48
        $region26: #{tpu_custom_call.1} parent=23 // pred_check_branch
          %176 = sbr.rel (%p174) target = $region28
        $region27: #{tpu_custom_call.1} parent=23 // pred_region
          #allocation9 [shape = 'u32[6]{0}', space=smem, size = 0x18, scoped, tag = 'DMA stride descriptor']
          %s177 = sand.u32 %s38, 1
          %s178 = scalar_lea.sflag [#allocation3], %s177
          %s179 = sand.u32 %s38, 1
          %s180 = smul.addr %s179, 176
          %s181 = scalar_lea.vmem [#allocation2], %s180
          %s183 = ssub.s32 2816, 2816
          %184 = vsyncadd %s178, %s183
          %s185 = smul.addr %s23, 11
          %s186 = smul.addr %s185, 64
          %s187 = scalar_lea.hbm %s0, %s186
          %s189 = sshll.u32 1, 14
          %s190 = sxor.u32 4294967295, %s189
          %s192 = sld [smem:[#allocation0]]
          %s193 = sadd.s32 2, %s192
          %s195 = sshll.u32 7, 26
          %s196 = sxor.u32 4294967295, %s195
          %s197 = sand.u32 0, %s196
          %s198 = sshll.u32 %s193, 26
          %s199 = sor.u32 %s197, %s198
          %s200 = sshll.u32 %s181, 4
          %s201 = int_to_ptr.vmem [resolvable:$true] %s200
          %207 = sst [smem:[#allocation9]] 1408
          %s208 = scalar_lea.smem [#allocation9], 1
          %209 = sst [smem:[%s208]] 704
          %s210 = scalar_lea.smem [#allocation9], 2
          %211 = sst [smem:[%s210]] 11
          %s212 = scalar_lea.smem [#allocation9], 3
          %213 = sst [smem:[%s212]] 64
          %s214 = scalar_lea.smem [#allocation9], 4
          %215 = sst [smem:[%s214]] 64
          %s216 = scalar_lea.smem [#allocation9], 5
          %217 = sst [smem:[%s216]] 4
          %219 = dma.general %s187, 2816, %s201, %s178, [#allocation8], [#allocation9], %s199, 0
        $region28: #{tpu_custom_call.1} parent=23 // pred_fallthru
          _
      $region24: #{tpu_custom_call.1} parent=5 // pred_fallthru
        _
      %p220 = scmp.le.s32.totalorder 1, %s16
      %p221 = scmp.lt.s32.totalorder %s16, 3
      %p222 = pnand %p220, %p221
      %p223 = pneg %p222
      // Predicated region
      $region29: #{tpu_custom_call.1} parent=5 // pred_check
        _
      $region30: #{tpu_custom_call.1} parent=5 // pred_check_branch
        %225 = sbr.rel (%p222) target = $region32
      $region31: #{tpu_custom_call.1} parent=5 // pred_region
        %s226 = ssub.s32 %s16, 1
        %s227 = sand.u32 %s41, 1
        %s228 = scalar_lea.sflag [#allocation3], %s227
        %s229 = sand.u32 %s41, 1
        %s230 = smul.addr %s229, 176
        %s231 = scalar_lea.vmem [#allocation2], %s230
        // Predicated region
        $region33: #{tpu_custom_call.1} parent=31 // pred_check
          %p232 = pneg %p54
        $region34: #{tpu_custom_call.1} parent=31 // pred_check_branch
          %234 = sbr.rel (%p232) target = $region36
        $region35: #{tpu_custom_call.1} parent=31 // pred_region
          %235 = dma.done %s228, 2816
        $region36: #{tpu_custom_call.1} parent=31 // pred_fallthru
          _
        // Predicated region
        $region37: #{tpu_custom_call.1} parent=31 // pred_check
          %p236 = pneg %p80
        $region38: #{tpu_custom_call.1} parent=31 // pred_check_branch
          %238 = sbr.rel (%p236) target = $region40
        $region39: #{tpu_custom_call.1} parent=31 // pred_region
          %239 = dma.done [#allocation6], 9216
        $region40: #{tpu_custom_call.1} parent=31 // pred_fallthru
          _
        %s240 = sand.u32 %s41, 1
        %s241 = scalar_lea.sflag [#allocation3], %s240
        %s242 = sand.u32 %s41, 1
        %s243 = smul.addr %s242, 176
        %s244 = scalar_lea.vmem [#allocation2], %s243
        %p245 = pneg %p54
        %p246 = pneg %p51
        %p247 = pneg %p80
        %p248 = pneg %p77
        %p249 = scmp.lt.s32.totalorder %s26, 0
        %s250 = scalar_select %p249, %s26, 0
        %s251 = scalar_lea.vmem %s2, %s250
        %p252 = pneg %p106
        %p253 = pneg %p103
        %p254 = pneg %p134
        %p255 = pneg %p131
        %s256 = sand.u32 %s121, 1
        %s257 = scalar_lea.sflag [#allocation4], %s256
        %s258 = sand.u32 %s121, 1
        %s259 = smul.addr %s258, 36
        %s260 = scalar_lea.vmem [#allocation7], %s259
        %p261 = scmp.lt.s32.totalorder %s26, 0
        %s262 = scalar_select %p261, %s26, 0
        %s263 = scalar_lea.vmem %s2, %s262
        %v265 = vld [vmem:[%s231] sm:$0xf]
        %v266 = vld [vmem:[%s231 + $0x4] sm:$0xf]
        %v267 = vld [vmem:[%s231 + $0x8] sm:$0xf]
        %v268 = vld [vmem:[%s231 + $0xc] sm:$0xf]
        %v269 = vld [vmem:[%s231 + $0x10] sm:$0xf]
        %v270 = vld [vmem:[%s231 + $0x14] sm:$0xf]
        %v271 = vld [vmem:[%s231 + $0x18] sm:$0xf]
        %v272 = vld [vmem:[%s231 + $0x1c] sm:$0xf]
        %v273 = vld [vmem:[%s231 + $0x20] sm:$0xf]
        %v274 = vld [vmem:[#allocation5] sm:$0xf]
        %v275 = vld [vmem:[#allocation5 + $0x4] sm:$0xf]
        %v276 = vld [vmem:[#allocation5 + $0x8] sm:$0xf]
        %v277 = vld [vmem:[#allocation5 + $0xc] sm:$0xf]
        %v278 = vld [vmem:[#allocation5 + $0x10] sm:$0xf]
        %v279 = vld [vmem:[#allocation5 + $0x14] sm:$0xf]
        %v280 = vld [vmem:[#allocation5 + $0x18] sm:$0xf]
        %v281 = vld [vmem:[#allocation5 + $0x1c] sm:$0xf]
        %v282 = vld [vmem:[#allocation5 + $0x20] sm:$0xf]
        %v283 = vld [vmem:[#allocation5 + $0x24] sm:$0xf]
        %v284 = vld [vmem:[#allocation5 + $0x28] sm:$0xf]
        %v285 = vld [vmem:[#allocation5 + $0x2c] sm:$0xf]
        %v286 = vld [vmem:[#allocation5 + $0x30] sm:$0xf]
        %v287 = vld [vmem:[#allocation5 + $0x34] sm:$0xf]
        %v288 = vld [vmem:[#allocation5 + $0x38] sm:$0xf]
        %v289 = vld [vmem:[#allocation5 + $0x3c] sm:$0xf]
        %s290 = scalar_lea.vmem %s231, 44 [#allocation2]
        %v291 = vld [vmem:[%s290] sm:$0xf]
        %v292 = vld [vmem:[%s290 + $0x4] sm:$0xf]
        %v293 = vld [vmem:[%s290 + $0x8] sm:$0xf]
        %v294 = vld [vmem:[%s290 + $0xc] sm:$0xf]
        %v295 = vld [vmem:[%s290 + $0x10] sm:$0xf]
        %v296 = vld [vmem:[%s290 + $0x14] sm:$0xf]
        %v297 = vld [vmem:[%s290 + $0x18] sm:$0xf]
        %v298 = vld [vmem:[%s290 + $0x1c] sm:$0xf]
        %v299 = vld [vmem:[%s290 + $0x20] sm:$0xf]
        %s300 = scalar_lea.vmem [#allocation5], 64
        %v301 = vld [vmem:[%s300] sm:$0xf]
        %v302 = vld [vmem:[%s300 + $0x4] sm:$0xf]
        %v303 = vld [vmem:[%s300 + $0x8] sm:$0xf]
        %v304 = vld [vmem:[%s300 + $0xc] sm:$0xf]
        %v305 = vld [vmem:[%s300 + $0x10] sm:$0xf]
        %v306 = vld [vmem:[%s300 + $0x14] sm:$0xf]
        %v307 = vld [vmem:[%s300 + $0x18] sm:$0xf]
        %v308 = vld [vmem:[%s300 + $0x1c] sm:$0xf]
        %v309 = vld [vmem:[%s300 + $0x20] sm:$0xf]
        %v310 = vld [vmem:[%s300 + $0x24] sm:$0xf]
        %v311 = vld [vmem:[%s300 + $0x28] sm:$0xf]
        %v312 = vld [vmem:[%s300 + $0x2c] sm:$0xf]
        %v313 = vld [vmem:[%s300 + $0x30] sm:$0xf]
        %v314 = vld [vmem:[%s300 + $0x34] sm:$0xf]
        %v315 = vld [vmem:[%s300 + $0x38] sm:$0xf]
        %v316 = vld [vmem:[%s300 + $0x3c] sm:$0xf]
        %v326 = vunpack.c.l.b16 %v291
        %v327 = vunpack.c.l.b16 %v292
        %v328 = vunpack.c.l.b16 %v293
        %v329 = vunpack.c.l.b16 %v294
        %v330 = vunpack.c.l.b16 %v295
        %v331 = vunpack.c.l.b16 %v296
        %v332 = vunpack.c.l.b16 %v297
        %v333 = vunpack.c.l.b16 %v298
        %v334 = vunpack.c.l.b16 %v299
        %v335 = vpack.c.b16 %v327, %v326
        %v336 = vpack.c.b16 %v329, %v328
        %v337 = vpack.c.b16 %v331, %v330
        %v338 = vpack.c.b16 %v333, %v332
        %v339 = vpack.c.b16 %v334, %v334
        %v361 = vunpack.c.l.b16 %v301
        %v362 = vunpack.c.l.b16 %v302
        %v363 = vunpack.c.l.b16 %v303
        %v364 = vunpack.c.l.b16 %v304
        %v365 = vunpack.c.l.b16 %v305
        %v366 = vunpack.c.l.b16 %v306
        %v367 = vunpack.c.l.b16 %v307
        %v368 = vunpack.c.l.b16 %v308
        %v369 = vunpack.c.l.b16 %v309
        %v370 = vunpack.c.l.b16 %v310
        %v371 = vunpack.c.l.b16 %v311
        %v372 = vunpack.c.l.b16 %v312
        %v373 = vunpack.c.l.b16 %v313
        %v374 = vunpack.c.l.b16 %v314
        %v375 = vunpack.c.l.b16 %v315
        %v376 = vunpack.c.l.b16 %v316
        %v377 = vpack.c.b16 %v362, %v361
        %v378 = vpack.c.b16 %v364, %v363
        %v379 = vpack.c.b16 %v366, %v365
        %v380 = vpack.c.b16 %v368, %v367
        %v381 = vpack.c.b16 %v370, %v369
        %v382 = vpack.c.b16 %v372, %v371
        %v383 = vpack.c.b16 %v374, %v373
        %v384 = vpack.c.b16 %v376, %v375
        %393 = vmatprep.subr.bf16.mxu0 0
        %394 = vmatpush1.bf16.msra.mxu0 %v377
        %395 = vmatprep.subr.bf16.mxu0 0
        %396 = vmatpush1.bf16.msra.mxu0 %v378
        %397 = vmatprep.subr.bf16.mxu0 0
        %398 = vmatpush1.bf16.msra.mxu0 %v379
        %399 = vmatprep.subr.bf16.mxu0 0
        %400 = vmatpush1.bf16.msra.mxu0 %v380
        %401 = vmatprep.subr.bf16.mxu0 0
        %402 = vmatpush1.bf16.msra.mxu0 %v381
        %403 = vmatprep.subr.bf16.mxu0 0
        %404 = vmatpush1.bf16.msra.mxu0 %v382
        %405 = vmatprep.subr.bf16.mxu0 0
        %406 = vmatpush1.bf16.msra.mxu0 %v383
        %407 = vmatprep.subr.bf16.mxu0 0
        %408 = vmatpush1.bf16.msra.mxu0 %v384
        %409 = vmatprep.subr.bf16.mxu0 0
        %410 = vmatpush1.bf16.msra.mxu0 0
        %411 = vmatprep.subr.bf16.mxu0 0
        %412 = vmatpush1.bf16.msra.mxu0 0
        %413 = vmatprep.subr.bf16.mxu0 0
        %414 = vmatpush1.bf16.msra.mxu0 0
        %415 = vmatprep.subr.bf16.mxu0 0
        %416 = vmatpush1.bf16.msra.mxu0 0
        %417 = vmatprep.subr.bf16.mxu0 0
        %418 = vmatpush1.bf16.msra.mxu0 0
        %419 = vmatprep.subr.bf16.mxu0 0
        %420 = vmatpush1.bf16.msra.mxu0 0
        %421 = vmatprep.subr.bf16.mxu0 0
        %422 = vmatpush1.bf16.msra.mxu0 0
        %423 = vmatprep.subr.bf16.mxu0 0
        %424 = vmatpush1.bf16.msra.mxu0 0
        %425 = vmatprep.mubr.bf16.mxu0 0
        %426 = vmatmul.mubr.bf16.gmra.mrb[0].mxu0 %v335
        %v427 = vpop.f32.mrb[0].mxu0
        %v428 = vadd.f32 0.0, %v427
        %v429 = vpop.f32.mrb[0].mxu0
        %v430 = vpop.f32.mrb[0].mxu0
        %v431 = vadd.f32 0.0, %v430
        %v432 = vpop.f32.mrb[0].mxu0
        %433 = vmatprep.mubr.bf16.mxu0 0
        %434 = vmatmul.mubr.bf16.gmra.mrb[0].mxu0 %v336
        %v435 = vpop.f32.mrb[0].mxu0
        %v436 = vadd.f32 0.0, %v435
        %v437 = vpop.f32.mrb[0].mxu0
        %v438 = vpop.f32.mrb[0].mxu0
        %v439 = vadd.f32 0.0, %v438
        %v440 = vpop.f32.mrb[0].mxu0
        %441 = vmatprep.mubr.bf16.mxu0 0
        %442 = vmatmul.mubr.bf16.gmra.mrb[0].mxu0 %v337
        %v443 = vpop.f32.mrb[0].mxu0
        %v444 = vadd.f32 0.0, %v443
        %v445 = vpop.f32.mrb[0].mxu0
        %v446 = vpop.f32.mrb[0].mxu0
        %v447 = vadd.f32 0.0, %v446
        %v448 = vpop.f32.mrb[0].mxu0
        %449 = vmatprep.mubr.bf16.mxu0 0
        %450 = vmatmul.mubr.bf16.gmra.mrb[0].mxu0 %v338
        %v451 = vpop.f32.mrb[0].mxu0
        %v452 = vadd.f32 0.0, %v451
        %v453 = vpop.f32.mrb[0].mxu0
        %v454 = vpop.f32.mrb[0].mxu0
        %v455 = vadd.f32 0.0, %v454
        %v456 = vpop.f32.mrb[0].mxu0
        %457 = vmatprep.mubr.bf16.mxu0 0
        %458 = vmatmul.mubr.bf16.gmra.mrb[0].mxu0 %v339
        %v459 = vpop.f32.mrb[0].mxu0
        %v460 = vadd.f32 0.0, %v459
        %v461 = vpop.f32.mrb[0].mxu0
        %v462 = vpop.f32.mrb[0].mxu0
        %v463 = vpop.f32.mrb[0].mxu0
        %464 = vdwg.mxu0
        %v474 = vunpack.c.l.b16 %v265
        %v475 = vunpack.c.l.b16 %v266
        %v476 = vunpack.c.l.b16 %v267
        %v477 = vunpack.c.l.b16 %v268
        %v478 = vunpack.c.l.b16 %v269
        %v479 = vunpack.c.l.b16 %v270
        %v480 = vunpack.c.l.b16 %v271
        %v481 = vunpack.c.l.b16 %v272
        %v482 = vunpack.c.l.b16 %v273
        %v483 = vpack.c.b16 %v475, %v474
        %v484 = vpack.c.b16 %v477, %v476
        %v485 = vpack.c.b16 %v479, %v478
        %v486 = vpack.c.b16 %v481, %v480
        %v487 = vpack.c.b16 %v482, %v482
        %v509 = vunpack.c.l.b16 %v274
        %v510 = vunpack.c.l.b16 %v275
        %v511 = vunpack.c.l.b16 %v276
        %v512 = vunpack.c.l.b16 %v277
        %v513 = vunpack.c.l.b16 %v278
        %v514 = vunpack.c.l.b16 %v279
        %v515 = vunpack.c.l.b16 %v280
        %v516 = vunpack.c.l.b16 %v281
        %v517 = vunpack.c.l.b16 %v282
        %v518 = vunpack.c.l.b16 %v283
        %v519 = vunpack.c.l.b16 %v284
        %v520 = vunpack.c.l.b16 %v285
        %v521 = vunpack.c.l.b16 %v286
        %v522 = vunpack.c.l.b16 %v287
        %v523 = vunpack.c.l.b16 %v288
        %v524 = vunpack.c.l.b16 %v289
        %v525 = vpack.c.b16 %v510, %v509
        %v526 = vpack.c.b16 %v512, %v511
        %v527 = vpack.c.b16 %v514, %v513
        %v528 = vpack.c.b16 %v516, %v515
        %v529 = vpack.c.b16 %v518, %v517
        %v530 = vpack.c.b16 %v520, %v519
        %v531 = vpack.c.b16 %v522, %v521
        %v532 = vpack.c.b16 %v524, %v523
        %541 = vmatprep.subr.bf16.mxu0 0
        %542 = vmatpush1.bf16.msra.mxu0 %v525
        %543 = vmatprep.subr.bf16.mxu0 0
        %544 = vmatpush1.bf16.msra.mxu0 %v526
        %545 = vmatprep.subr.bf16.mxu0 0
        %546 = vmatpush1.bf16.msra.mxu0 %v527
        %547 = vmatprep.subr.bf16.mxu0 0
        %548 = vmatpush1.bf16.msra.mxu0 %v528
        %549 = vmatprep.subr.bf16.mxu0 0
        %550 = vmatpush1.bf16.msra.mxu0 %v529
        %551 = vmatprep.subr.bf16.mxu0 0
        %552 = vmatpush1.bf16.msra.mxu0 %v530
        %553 = vmatprep.subr.bf16.mxu0 0
        %554 = vmatpush1.bf16.msra.mxu0 %v531
        %555 = vmatprep.subr.bf16.mxu0 0
        %556 = vmatpush1.bf16.msra.mxu0 %v532
        %557 = vmatprep.subr.bf16.mxu0 0
        %558 = vmatpush1.bf16.msra.mxu0 0
        %559 = vmatprep.subr.bf16.mxu0 0
        %560 = vmatpush1.bf16.msra.mxu0 0
        %561 = vmatprep.subr.bf16.mxu0 0
        %562 = vmatpush1.bf16.msra.mxu0 0
        %563 = vmatprep.subr.bf16.mxu0 0
        %564 = vmatpush1.bf16.msra.mxu0 0
        %565 = vmatprep.subr.bf16.mxu0 0
        %566 = vmatpush1.bf16.msra.mxu0 0
        %567 = vmatprep.subr.bf16.mxu0 0
        %568 = vmatpush1.bf16.msra.mxu0 0
        %569 = vmatprep.subr.bf16.mxu0 0
        %570 = vmatpush1.bf16.msra.mxu0 0
        %571 = vmatprep.subr.bf16.mxu0 0
        %572 = vmatpush1.bf16.msra.mxu0 0
        %573 = vmatprep.mubr.bf16.mxu0 0
        %574 = vmatmul.mubr.bf16.gmra.mrb[0].mxu0 %v483
        %v575 = vpop.f32.mrb[0].mxu0
        %v576 = vadd.f32 %v428, %v575
        %v577 = vpop.f32.mrb[0].mxu0
        %v578 = vpop.f32.mrb[0].mxu0
        %v579 = vadd.f32 %v431, %v578
        %v580 = vpop.f32.mrb[0].mxu0
        %581 = vmatprep.mubr.bf16.mxu0 0
        %582 = vmatmul.mubr.bf16.gmra.mrb[0].mxu0 %v484
        %v583 = vpop.f32.mrb[0].mxu0
        %v584 = vadd.f32 %v436, %v583
        %v585 = vpop.f32.mrb[0].mxu0
        %v586 = vpop.f32.mrb[0].mxu0
        %v587 = vadd.f32 %v439, %v586
        %v588 = vpop.f32.mrb[0].mxu0
        %589 = vmatprep.mubr.bf16.mxu0 0
        %590 = vmatmul.mubr.bf16.gmra.mrb[0].mxu0 %v485
        %v591 = vpop.f32.mrb[0].mxu0
        %v592 = vadd.f32 %v444, %v591
        %v593 = vpop.f32.mrb[0].mxu0
        %v594 = vpop.f32.mrb[0].mxu0
        %v595 = vadd.f32 %v447, %v594
        %v596 = vpop.f32.mrb[0].mxu0
        %597 = vmatprep.mubr.bf16.mxu0 0
        %598 = vmatmul.mubr.bf16.gmra.mrb[0].mxu0 %v486
        %v599 = vpop.f32.mrb[0].mxu0
        %v600 = vadd.f32 %v452, %v599
        %v601 = vpop.f32.mrb[0].mxu0
        %v602 = vpop.f32.mrb[0].mxu0
        %v603 = vadd.f32 %v455, %v602
        %v604 = vpop.f32.mrb[0].mxu0
        %605 = vmatprep.mubr.bf16.mxu0 0
        %606 = vmatmul.mubr.bf16.gmra.mrb[0].mxu0 %v487
        %v607 = vpop.f32.mrb[0].mxu0
        %v608 = vadd.f32 %v460, %v607
        %v609 = vpop.f32.mrb[0].mxu0
        %v610 = vpop.f32.mrb[0].mxu0
        %v611 = vpop.f32.mrb[0].mxu0
        %612 = vdwg.mxu0
        %v613 = vld [vmem:[%s231] sm:$0xf]
        %v614 = vld [vmem:[%s231 + $0x4] sm:$0xf]
        %v615 = vld [vmem:[%s231 + $0x8] sm:$0xf]
        %v616 = vld [vmem:[%s231 + $0xc] sm:$0xf]
        %v617 = vld [vmem:[%s231 + $0x10] sm:$0xf]
        %v618 = vld [vmem:[%s231 + $0x14] sm:$0xf]
        %v619 = vld [vmem:[%s231 + $0x18] sm:$0xf]
        %v620 = vld [vmem:[%s231 + $0x1c] sm:$0xf]
        %v621 = vld [vmem:[%s231 + $0x20] sm:$0xf]
        %v622 = vld [vmem:[%s231 + $0x24] sm:$0x1]
        %s623 = scalar_lea.vmem [#allocation5], 128
        %v624 = vld [vmem:[%s623] sm:$0xf]
        %v625 = vld [vmem:[%s623 + $0x4] sm:$0xf]
        %v626 = vld [vmem:[%s623 + $0x8] sm:$0xf]
        %v627 = vld [vmem:[%s623 + $0xc] sm:$0xf]
        %v628 = vld [vmem:[%s623 + $0x10] sm:$0xf]
        %v629 = vld [vmem:[%s623 + $0x14] sm:$0xf]
        %v630 = vld [vmem:[%s623 + $0x18] sm:$0xf]
        %v631 = vld [vmem:[%s623 + $0x1c] sm:$0xf]
        %v632 = vld [vmem:[%s623 + $0x20] sm:$0xf]
        %v633 = vld [vmem:[%s623 + $0x24] sm:$0xf]
        %v634 = vld [vmem:[%s623 + $0x28] sm:$0xf]
        %v635 = vld [vmem:[%s623 + $0x2c] sm:$0xf]
        %v636 = vld [vmem:[%s623 + $0x30] sm:$0xf]
        %v637 = vld [vmem:[%s623 + $0x34] sm:$0xf]
        %v638 = vld [vmem:[%s623 + $0x38] sm:$0xf]
        %v639 = vld [vmem:[%s623 + $0x3c] sm:$0xf]
        %v650 = vunpack.c.l.b16 %v613
        %v651 = vunpack.c.l.b16 %v614
        %v652 = vunpack.c.l.b16 %v615
        %v653 = vunpack.c.l.b16 %v616
        %v654 = vunpack.c.l.b16 %v617
        %v655 = vunpack.c.l.b16 %v618
        %v656 = vunpack.c.l.b16 %v619
        %v657 = vunpack.c.l.b16 %v620
        %v658 = vunpack.c.l.b16 %v621
        %v659 = vunpack.c.l.b16 %v622
        %v660 = vpack.c.b16 %v651, %v650
        %v661 = vpack.c.b16 %v653, %v652
        %v662 = vpack.c.b16 %v655, %v654
        %v663 = vpack.c.b16 %v657, %v656
        %v664 = vpack.c.b16 %v659, %v658
        %vm665 = vsmask.f32 7424
        %v667 = vshrl.u32 %v660, 16
        %v669 = vshll.u32 %v660, 16
        %v671 = vrot.slane %v669, 1
        %v672 = vor.u32 %v667, %v671
        %v674 = vshll.u32 %v661, 16
        %v676 = vrot.slane %v674, 1
        %v677 = vsel %vm665, %v672, %v676
        %v678 = vshrl.u32 %v661, 16
        %v680 = vor.u32 %v678, %v676
        %v682 = vshll.u32 %v662, 16
        %v684 = vrot.slane %v682, 1
        %v685 = vsel %vm665, %v680, %v684
        %v686 = vshrl.u32 %v662, 16
        %v688 = vor.u32 %v686, %v684
        %v690 = vshll.u32 %v663, 16
        %v692 = vrot.slane %v690, 1
        %v693 = vsel %vm665, %v688, %v692
        %v694 = vshrl.u32 %v663, 16
        %v696 = vor.u32 %v694, %v692
        %v698 = vshll.u32 %v664, 16
        %v700 = vrot.slane %v698, 1
        %v701 = vsel %vm665, %v696, %v700
        %v702 = vshrl.u32 %v664, 16
        %v704 = vor.u32 %v702, %v700
        %v726 = vunpack.c.l.b16 %v624
        %v727 = vunpack.c.l.b16 %v625
        %v728 = vunpack.c.l.b16 %v626
        %v729 = vunpack.c.l.b16 %v627
        %v730 = vunpack.c.l.b16 %v628
        %v731 = vunpack.c.l.b16 %v629
        %v732 = vunpack.c.l.b16 %v630
        %v733 = vunpack.c.l.b16 %v631
        %v734 = vunpack.c.l.b16 %v632
        %v735 = vunpack.c.l.b16 %v633
        %v736 = vunpack.c.l.b16 %v634
        %v737 = vunpack.c.l.b16 %v635
        %v738 = vunpack.c.l.b16 %v636
        %v739 = vunpack.c.l.b16 %v637
        %v740 = vunpack.c.l.b16 %v638
        %v741 = vunpack.c.l.b16 %v639
        %v742 = vpack.c.b16 %v727, %v726
        %v743 = vpack.c.b16 %v729, %v728
        %v744 = vpack.c.b16 %v731, %v730
        %v745 = vpack.c.b16 %v733, %v732
        %v746 = vpack.c.b16 %v735, %v734
        %v747 = vpack.c.b16 %v737, %v736
        %v748 = vpack.c.b16 %v739, %v738
        %v749 = vpack.c.b16 %v741, %v740
        %758 = vmatprep.subr.bf16.mxu0 0
        %759 = vmatpush1.bf16.msra.mxu0 %v742
        %760 = vmatprep.subr.bf16.mxu0 0
        %761 = vmatpush1.bf16.msra.mxu0 %v743
        %762 = vmatprep.subr.bf16.mxu0 0
        %763 = vmatpush1.bf16.msra.mxu0 %v744
        %764 = vmatprep.subr.bf16.mxu0 0
        %765 = vmatpush1.bf16.msra.mxu0 %v745
        %766 = vmatprep.subr.bf16.mxu0 0
        %767 = vmatpush1.bf16.msra.mxu0 %v746
        %768 = vmatprep.subr.bf16.mxu0 0
        %769 = vmatpush1.bf16.msra.mxu0 %v747
        %770 = vmatprep.subr.bf16.mxu0 0
        %771 = vmatpush1.bf16.msra.mxu0 %v748
        %772 = vmatprep.subr.bf16.mxu0 0
        %773 = vmatpush1.bf16.msra.mxu0 %v749
        %774 = vmatprep.subr.bf16.mxu0 0
        %775 = vmatpush1.bf16.msra.mxu0 0
        %776 = vmatprep.subr.bf16.mxu0 0
        %777 = vmatpush1.bf16.msra.mxu0 0
        %778 = vmatprep.subr.bf16.mxu0 0
        %779 = vmatpush1.bf16.msra.mxu0 0
        %780 = vmatprep.subr.bf16.mxu0 0
        %781 = vmatpush1.bf16.msra.mxu0 0
        %782 = vmatprep.subr.bf16.mxu0 0
        %783 = vmatpush1.bf16.msra.mxu0 0
        %784 = vmatprep.subr.bf16.mxu0 0
        %785 = vmatpush1.bf16.msra.mxu0 0
        %786 = vmatprep.subr.bf16.mxu0 0
        %787 = vmatpush1.bf16.msra.mxu0 0
        %788 = vmatprep.subr.bf16.mxu0 0
        %789 = vmatpush1.bf16.msra.mxu0 0
        %790 = vmatprep.mubr.bf16.mxu0 0
        %791 = vmatmul.mubr.bf16.gmra.mrb[0].mxu0 %v677
        %v792 = vpop.f32.mrb[0].mxu0
        %v793 = vadd.f32 0.0, %v792
        %v794 = vpop.f32.mrb[0].mxu0
        %v795 = vpop.f32.mrb[0].mxu0
        %v796 = vadd.f32 0.0, %v795
        %v797 = vpop.f32.mrb[0].mxu0
        %798 = vmatprep.mubr.bf16.mxu0 0
        %799 = vmatmul.mubr.bf16.gmra.mrb[0].mxu0 %v685
        %v800 = vpop.f32.mrb[0].mxu0
        %v801 = vadd.f32 0.0, %v800
        %v802 = vpop.f32.mrb[0].mxu0
        %v803 = vpop.f32.mrb[0].mxu0
        %v804 = vadd.f32 0.0, %v803
        %v805 = vpop.f32.mrb[0].mxu0
        %806 = vmatprep.mubr.bf16.mxu0 0
        %807 = vmatmul.mubr.bf16.gmra.mrb[0].mxu0 %v693
        %v808 = vpop.f32.mrb[0].mxu0
        %v809 = vadd.f32 0.0, %v808
        %v810 = vpop.f32.mrb[0].mxu0
        %v811 = vpop.f32.mrb[0].mxu0
        %v812 = vadd.f32 0.0, %v811
        %v813 = vpop.f32.mrb[0].mxu0
        %814 = vmatprep.mubr.bf16.mxu0 0
        %815 = vmatmul.mubr.bf16.gmra.mrb[0].mxu0 %v701
        %v816 = vpop.f32.mrb[0].mxu0
        %v817 = vadd.f32 0.0, %v816
        %v818 = vpop.f32.mrb[0].mxu0
        %v819 = vpop.f32.mrb[0].mxu0
        %v820 = vadd.f32 0.0, %v819
        %v821 = vpop.f32.mrb[0].mxu0
        %822 = vmatprep.mubr.bf16.mxu0 0
        %823 = vmatmul.mubr.bf16.gmra.mrb[0].mxu0 %v704
        %v824 = vpop.f32.mrb[0].mxu0
        %v825 = vadd.f32 0.0, %v824
        %v826 = vpop.f32.mrb[0].mxu0
        %v827 = vpop.f32.mrb[0].mxu0
        %v828 = vpop.f32.mrb[0].mxu0
        %829 = vdwg.mxu0
        %v830 = vadd.f32 %v576, %v793
        %v831 = vadd.f32 %v579, %v796
        %v832 = vadd.f32 %v584, %v801
        %v833 = vadd.f32 %v587, %v804
        %v834 = vadd.f32 %v592, %v809
        %v835 = vadd.f32 %v595, %v812
        %v836 = vadd.f32 %v600, %v817
        %v837 = vadd.f32 %v603, %v820
        %v838 = vadd.f32 %v608, %v825
        %s839 = scalar_lea.vmem %s231, 88 [#allocation2]
        %v840 = vld [vmem:[%s839] sm:$0xf]
        %v841 = vld [vmem:[%s839 + $0x4] sm:$0xf]
        %v842 = vld [vmem:[%s839 + $0x8] sm:$0xf]
        %v843 = vld [vmem:[%s839 + $0xc] sm:$0xf]
        %v844 = vld [vmem:[%s839 + $0x10] sm:$0xf]
        %v845 = vld [vmem:[%s839 + $0x14] sm:$0xf]
        %v846 = vld [vmem:[%s839 + $0x18] sm:$0xf]
        %v847 = vld [vmem:[%s839 + $0x1c] sm:$0xf]
        %v848 = vld [vmem:[%s839 + $0x20] sm:$0xf]
        %s849 = scalar_lea.vmem [#allocation5], 192
        %v850 = vld [vmem:[%s849] sm:$0xf]
        %v851 = vld [vmem:[%s849 + $0x4] sm:$0xf]
        %v852 = vld [vmem:[%s849 + $0x8] sm:$0xf]
        %v853 = vld [vmem:[%s849 + $0xc] sm:$0xf]
        %v854 = vld [vmem:[%s849 + $0x10] sm:$0xf]
        %v855 = vld [vmem:[%s849 + $0x14] sm:$0xf]
        %v856 = vld [vmem:[%s849 + $0x18] sm:$0xf]
        %v857 = vld [vmem:[%s849 + $0x1c] sm:$0xf]
        %v858 = vld [vmem:[%s849 + $0x20] sm:$0xf]
        %v859 = vld [vmem:[%s849 + $0x24] sm:$0xf]
        %v860 = vld [vmem:[%s849 + $0x28] sm:$0xf]
        %v861 = vld [vmem:[%s849 + $0x2c] sm:$0xf]
        %v862 = vld [vmem:[%s849 + $0x30] sm:$0xf]
        %v863 = vld [vmem:[%s849 + $0x34] sm:$0xf]
        %v864 = vld [vmem:[%s849 + $0x38] sm:$0xf]
        %v865 = vld [vmem:[%s849 + $0x3c] sm:$0xf]
        %v875 = vunpack.c.l.b16 %v840
        %v876 = vunpack.c.l.b16 %v841
        %v877 = vunpack.c.l.b16 %v842
        %v878 = vunpack.c.l.b16 %v843
        %v879 = vunpack.c.l.b16 %v844
        %v880 = vunpack.c.l.b16 %v845
        %v881 = vunpack.c.l.b16 %v846
        %v882 = vunpack.c.l.b16 %v847
        %v883 = vunpack.c.l.b16 %v848
        %v884 = vpack.c.b16 %v876, %v875
        %v885 = vpack.c.b16 %v878, %v877
        %v886 = vpack.c.b16 %v880, %v879
        %v887 = vpack.c.b16 %v882, %v881
        %v888 = vpack.c.b16 %v883, %v883
        %v910 = vunpack.c.l.b16 %v850
        %v911 = vunpack.c.l.b16 %v851
        %v912 = vunpack.c.l.b16 %v852
        %v913 = vunpack.c.l.b16 %v853
        %v914 = vunpack.c.l.b16 %v854
        %v915 = vunpack.c.l.b16 %v855
        %v916 = vunpack.c.l.b16 %v856
        %v917 = vunpack.c.l.b16 %v857
        %v918 = vunpack.c.l.b16 %v858
        %v919 = vunpack.c.l.b16 %v859
        %v920 = vunpack.c.l.b16 %v860
        %v921 = vunpack.c.l.b16 %v861
        %v922 = vunpack.c.l.b16 %v862
        %v923 = vunpack.c.l.b16 %v863
        %v924 = vunpack.c.l.b16 %v864
        %v925 = vunpack.c.l.b16 %v865
        %v926 = vpack.c.b16 %v911, %v910
        %v927 = vpack.c.b16 %v913, %v912
        %v928 = vpack.c.b16 %v915, %v914
        %v929 = vpack.c.b16 %v917, %v916
        %v930 = vpack.c.b16 %v919, %v918
        %v931 = vpack.c.b16 %v921, %v920
        %v932 = vpack.c.b16 %v923, %v922
        %v933 = vpack.c.b16 %v925, %v924
        %942 = vmatprep.subr.bf16.mxu0 0
        %943 = vmatpush1.bf16.msra.mxu0 %v926
        %944 = vmatprep.subr.bf16.mxu0 0
        %945 = vmatpush1.bf16.msra.mxu0 %v927
        %946 = vmatprep.subr.bf16.mxu0 0
        %947 = vmatpush1.bf16.msra.mxu0 %v928
        %948 = vmatprep.subr.bf16.mxu0 0
        %949 = vmatpush1.bf16.msra.mxu0 %v929
        %950 = vmatprep.subr.bf16.mxu0 0
        %951 = vmatpush1.bf16.msra.mxu0 %v930
        %952 = vmatprep.subr.bf16.mxu0 0
        %953 = vmatpush1.bf16.msra.mxu0 %v931
        %954 = vmatprep.subr.bf16.mxu0 0
        %955 = vmatpush1.bf16.msra.mxu0 %v932
        %956 = vmatprep.subr.bf16.mxu0 0
        %957 = vmatpush1.bf16.msra.mxu0 %v933
        %958 = vmatprep.subr.bf16.mxu0 0
        %959 = vmatpush1.bf16.msra.mxu0 0
        %960 = vmatprep.subr.bf16.mxu0 0
        %961 = vmatpush1.bf16.msra.mxu0 0
        %962 = vmatprep.subr.bf16.mxu0 0
        %963 = vmatpush1.bf16.msra.mxu0 0
        %964 = vmatprep.subr.bf16.mxu0 0
        %965 = vmatpush1.bf16.msra.mxu0 0
        %966 = vmatprep.subr.bf16.mxu0 0
        %967 = vmatpush1.bf16.msra.mxu0 0
        %968 = vmatprep.subr.bf16.mxu0 0
        %969 = vmatpush1.bf16.msra.mxu0 0
        %970 = vmatprep.subr.bf16.mxu0 0
        %971 = vmatpush1.bf16.msra.mxu0 0
        %972 = vmatprep.subr.bf16.mxu0 0
        %973 = vmatpush1.bf16.msra.mxu0 0
        %974 = vmatprep.mubr.bf16.mxu0 0
        %975 = vmatmul.mubr.bf16.gmra.mrb[0].mxu0 %v884
        %v976 = vpop.f32.mrb[0].mxu0
        %v977 = vadd.f32 0.0, %v976
        %v978 = vpop.f32.mrb[0].mxu0
        %v979 = vpop.f32.mrb[0].mxu0
        %v980 = vadd.f32 0.0, %v979
        %v981 = vpop.f32.mrb[0].mxu0
        %982 = vmatprep.mubr.bf16.mxu0 0
        %983 = vmatmul.mubr.bf16.gmra.mrb[0].mxu0 %v885
        %v984 = vpop.f32.mrb[0].mxu0
        %v985 = vadd.f32 0.0, %v984
        %v986 = vpop.f32.mrb[0].mxu0
        %v987 = vpop.f32.mrb[0].mxu0
        %v988 = vadd.f32 0.0, %v987
        %v989 = vpop.f32.mrb[0].mxu0
        %990 = vmatprep.mubr.bf16.mxu0 0
        %991 = vmatmul.mubr.bf16.gmra.mrb[0].mxu0 %v886
        %v992 = vpop.f32.mrb[0].mxu0
        %v993 = vadd.f32 0.0, %v992
        %v994 = vpop.f32.mrb[0].mxu0
        %v995 = vpop.f32.mrb[0].mxu0
        %v996 = vadd.f32 0.0, %v995
        %v997 = vpop.f32.mrb[0].mxu0
        %998 = vmatprep.mubr.bf16.mxu0 0
        %999 = vmatmul.mubr.bf16.gmra.mrb[0].mxu0 %v887
        %v1000 = vpop.f32.mrb[0].mxu0
        %v1001 = vadd.f32 0.0, %v1000
        %v1002 = vpop.f32.mrb[0].mxu0
        %v1003 = vpop.f32.mrb[0].mxu0
        %v1004 = vadd.f32 0.0, %v1003
        %v1005 = vpop.f32.mrb[0].mxu0
        %1006 = vmatprep.mubr.bf16.mxu0 0
        %1007 = vmatmul.mubr.bf16.gmra.mrb[0].mxu0 %v888
        %v1008 = vpop.f32.mrb[0].mxu0
        %v1009 = vadd.f32 0.0, %v1008
        %v1010 = vpop.f32.mrb[0].mxu0
        %v1011 = vpop.f32.mrb[0].mxu0
        %v1012 = vpop.f32.mrb[0].mxu0
        %1013 = vdwg.mxu0
        %v1014 = vadd.f32 %v830, %v977
        %v1015 = vadd.f32 %v831, %v980
        %v1016 = vadd.f32 %v832, %v985
        %v1017 = vadd.f32 %v833, %v988
        %v1018 = vadd.f32 %v834, %v993
        %v1019 = vadd.f32 %v835, %v996
        %v1020 = vadd.f32 %v836, %v1001
        %v1021 = vadd.f32 %v837, %v1004
        %v1022 = vadd.f32 %v838, %v1009
        %s1023 = scalar_lea.vmem %s231, 132 [#allocation2]
        %v1024 = vld [vmem:[%s1023] sm:$0xf]
        %v1025 = vld [vmem:[%s1023 + $0x4] sm:$0xf]
        %v1026 = vld [vmem:[%s1023 + $0x8] sm:$0xf]
        %v1027 = vld [vmem:[%s1023 + $0xc] sm:$0xf]
        %v1028 = vld [vmem:[%s1023 + $0x10] sm:$0xf]
        %v1029 = vld [vmem:[%s1023 + $0x14] sm:$0xf]
        %v1030 = vld [vmem:[%s1023 + $0x18] sm:$0xf]
        %v1031 = vld [vmem:[%s1023 + $0x1c] sm:$0xf]
        %v1032 = vld [vmem:[%s1023 + $0x20] sm:$0xf]
        %s1033 = scalar_lea.vmem [#allocation5], 256
        %v1034 = vld [vmem:[%s1033] sm:$0xf]
        %v1035 = vld [vmem:[%s1033 + $0x4] sm:$0xf]
        %v1036 = vld [vmem:[%s1033 + $0x8] sm:$0xf]
        %v1037 = vld [vmem:[%s1033 + $0xc] sm:$0xf]
        %v1038 = vld [vmem:[%s1033 + $0x10] sm:$0xf]
        %v1039 = vld [vmem:[%s1033 + $0x14] sm:$0xf]
        %v1040 = vld [vmem:[%s1033 + $0x18] sm:$0xf]
        %v1041 = vld [vmem:[%s1033 + $0x1c] sm:$0xf]
        %v1042 = vld [vmem:[%s1033 + $0x20] sm:$0xf]
        %v1043 = vld [vmem:[%s1033 + $0x24] sm:$0xf]
        %v1044 = vld [vmem:[%s1033 + $0x28] sm:$0xf]
        %v1045 = vld [vmem:[%s1033 + $0x2c] sm:$0xf]
        %v1046 = vld [vmem:[%s1033 + $0x30] sm:$0xf]
        %v1047 = vld [vmem:[%s1033 + $0x34] sm:$0xf]
        %v1048 = vld [vmem:[%s1033 + $0x38] sm:$0xf]
        %v1049 = vld [vmem:[%s1033 + $0x3c] sm:$0xf]
        %v1059 = vunpack.c.l.b16 %v1024
        %v1060 = vunpack.c.l.b16 %v1025
        %v1061 = vunpack.c.l.b16 %v1026
        %v1062 = vunpack.c.l.b16 %v1027
        %v1063 = vunpack.c.l.b16 %v1028
        %v1064 = vunpack.c.l.b16 %v1029
        %v1065 = vunpack.c.l.b16 %v1030
        %v1066 = vunpack.c.l.b16 %v1031
        %v1067 = vunpack.c.l.b16 %v1032
        %v1068 = vpack.c.b16 %v1060, %v1059
        %v1069 = vpack.c.b16 %v1062, %v1061
        %v1070 = vpack.c.b16 %v1064, %v1063
        %v1071 = vpack.c.b16 %v1066, %v1065
        %v1072 = vpack.c.b16 %v1067, %v1067
        %v1094 = vunpack.c.l.b16 %v1034
        %v1095 = vunpack.c.l.b16 %v1035
        %v1096 = vunpack.c.l.b16 %v1036
        %v1097 = vunpack.c.l.b16 %v1037
        %v1098 = vunpack.c.l.b16 %v1038
        %v1099 = vunpack.c.l.b16 %v1039
        %v1100 = vunpack.c.l.b16 %v1040
        %v1101 = vunpack.c.l.b16 %v1041
        %v1102 = vunpack.c.l.b16 %v1042
        %v1103 = vunpack.c.l.b16 %v1043
        %v1104 = vunpack.c.l.b16 %v1044
        %v1105 = vunpack.c.l.b16 %v1045
        %v1106 = vunpack.c.l.b16 %v1046
        %v1107 = vunpack.c.l.b16 %v1047
        %v1108 = vunpack.c.l.b16 %v1048
        %v1109 = vunpack.c.l.b16 %v1049
        %v1110 = vpack.c.b16 %v1095, %v1094
        %v1111 = vpack.c.b16 %v1097, %v1096
        %v1112 = vpack.c.b16 %v1099, %v1098
        %v1113 = vpack.c.b16 %v1101, %v1100
        %v1114 = vpack.c.b16 %v1103, %v1102
        %v1115 = vpack.c.b16 %v1105, %v1104
        %v1116 = vpack.c.b16 %v1107, %v1106
        %v1117 = vpack.c.b16 %v1109, %v1108
        %1126 = vmatprep.subr.bf16.mxu0 0
        %1127 = vmatpush1.bf16.msra.mxu0 %v1110
        %1128 = vmatprep.subr.bf16.mxu0 0
        %1129 = vmatpush1.bf16.msra.mxu0 %v1111
        %1130 = vmatprep.subr.bf16.mxu0 0
        %1131 = vmatpush1.bf16.msra.mxu0 %v1112
        %1132 = vmatprep.subr.bf16.mxu0 0
        %1133 = vmatpush1.bf16.msra.mxu0 %v1113
        %1134 = vmatprep.subr.bf16.mxu0 0
        %1135 = vmatpush1.bf16.msra.mxu0 %v1114
        %1136 = vmatprep.subr.bf16.mxu0 0
        %1137 = vmatpush1.bf16.msra.mxu0 %v1115
        %1138 = vmatprep.subr.bf16.mxu0 0
        %1139 = vmatpush1.bf16.msra.mxu0 %v1116
        %1140 = vmatprep.subr.bf16.mxu0 0
        %1141 = vmatpush1.bf16.msra.mxu0 %v1117
        %1142 = vmatprep.subr.bf16.mxu0 0
        %1143 = vmatpush1.bf16.msra.mxu0 0
        %1144 = vmatprep.subr.bf16.mxu0 0
        %1145 = vmatpush1.bf16.msra.mxu0 0
        %1146 = vmatprep.subr.bf16.mxu0 0
        %1147 = vmatpush1.bf16.msra.mxu0 0
        %1148 = vmatprep.subr.bf16.mxu0 0
        %1149 = vmatpush1.bf16.msra.mxu0 0
        %1150 = vmatprep.subr.bf16.mxu0 0
        %1151 = vmatpush1.bf16.msra.mxu0 0
        %1152 = vmatprep.subr.bf16.mxu0 0
        %1153 = vmatpush1.bf16.msra.mxu0 0
        %1154 = vmatprep.subr.bf16.mxu0 0
        %1155 = vmatpush1.bf16.msra.mxu0 0
        %1156 = vmatprep.subr.bf16.mxu0 0
        %1157 = vmatpush1.bf16.msra.mxu0 0
        %1158 = vmatprep.mubr.bf16.mxu0 0
        %1159 = vmatmul.mubr.bf16.gmra.mrb[0].mxu0 %v1068
        %v1160 = vpop.f32.mrb[0].mxu0
        %v1161 = vadd.f32 0.0, %v1160
        %v1162 = vpop.f32.mrb[0].mxu0
        %v1163 = vpop.f32.mrb[0].mxu0
        %v1164 = vadd.f32 0.0, %v1163
        %v1165 = vpop.f32.mrb[0].mxu0
        %1166 = vmatprep.mubr.bf16.mxu0 0
        %1167 = vmatmul.mubr.bf16.gmra.mrb[0].mxu0 %v1069
        %v1168 = vpop.f32.mrb[0].mxu0
        %v1169 = vadd.f32 0.0, %v1168
        %v1170 = vpop.f32.mrb[0].mxu0
        %v1171 = vpop.f32.mrb[0].mxu0
        %v1172 = vadd.f32 0.0, %v1171
        %v1173 = vpop.f32.mrb[0].mxu0
        %1174 = vmatprep.mubr.bf16.mxu0 0
        %1175 = vmatmul.mubr.bf16.gmra.mrb[0].mxu0 %v1070
        %v1176 = vpop.f32.mrb[0].mxu0
        %v1177 = vadd.f32 0.0, %v1176
        %v1178 = vpop.f32.mrb[0].mxu0
        %v1179 = vpop.f32.mrb[0].mxu0
        %v1180 = vadd.f32 0.0, %v1179
        %v1181 = vpop.f32.mrb[0].mxu0
        %1182 = vmatprep.mubr.bf16.mxu0 0
        %1183 = vmatmul.mubr.bf16.gmra.mrb[0].mxu0 %v1071
        %v1184 = vpop.f32.mrb[0].mxu0
        %v1185 = vadd.f32 0.0, %v1184
        %v1186 = vpop.f32.mrb[0].mxu0
        %v1187 = vpop.f32.mrb[0].mxu0
        %v1188 = vadd.f32 0.0, %v1187
        %v1189 = vpop.f32.mrb[0].mxu0
        %1190 = vmatprep.mubr.bf16.mxu0 0
        %1191 = vmatmul.mubr.bf16.gmra.mrb[0].mxu0 %v1072
        %v1192 = vpop.f32.mrb[0].mxu0
        %v1193 = vadd.f32 0.0, %v1192
        %v1194 = vpop.f32.mrb[0].mxu0
        %v1195 = vpop.f32.mrb[0].mxu0
        %v1196 = vpop.f32.mrb[0].mxu0
        %1197 = vdwg.mxu0
        %v1198 = vadd.f32 %v1014, %v1161
        %v1199 = vadd.f32 %v1015, %v1164
        %v1200 = vadd.f32 %v1016, %v1169
        %v1201 = vadd.f32 %v1017, %v1172
        %v1202 = vadd.f32 %v1018, %v1177
        %v1203 = vadd.f32 %v1019, %v1180
        %v1204 = vadd.f32 %v1020, %v1185
        %v1205 = vadd.f32 %v1021, %v1188
        %v1206 = vadd.f32 %v1022, %v1193
        %v1207 = vld [vmem:[%s839] sm:$0xf]
        %v1208 = vld [vmem:[%s839 + $0x4] sm:$0xf]
        %v1209 = vld [vmem:[%s839 + $0x8] sm:$0xf]
        %v1210 = vld [vmem:[%s839 + $0xc] sm:$0xf]
        %v1211 = vld [vmem:[%s839 + $0x10] sm:$0xf]
        %v1212 = vld [vmem:[%s839 + $0x14] sm:$0xf]
        %v1213 = vld [vmem:[%s839 + $0x18] sm:$0xf]
        %v1214 = vld [vmem:[%s839 + $0x1c] sm:$0xf]
        %v1215 = vld [vmem:[%s839 + $0x20] sm:$0xf]
        %v1216 = vld [vmem:[%s839 + $0x24] sm:$0x1]
        %s1217 = scalar_lea.vmem [#allocation5], 320
        %v1218 = vld [vmem:[%s1217] sm:$0xf]
        %v1219 = vld [vmem:[%s1217 + $0x4] sm:$0xf]
        %v1220 = vld [vmem:[%s1217 + $0x8] sm:$0xf]
        %v1221 = vld [vmem:[%s1217 + $0xc] sm:$0xf]
        %v1222 = vld [vmem:[%s1217 + $0x10] sm:$0xf]
        %v1223 = vld [vmem:[%s1217 + $0x14] sm:$0xf]
        %v1224 = vld [vmem:[%s1217 + $0x18] sm:$0xf]
        %v1225 = vld [vmem:[%s1217 + $0x1c] sm:$0xf]
        %v1226 = vld [vmem:[%s1217 + $0x20] sm:$0xf]
        %v1227 = vld [vmem:[%s1217 + $0x24] sm:$0xf]
        %v1228 = vld [vmem:[%s1217 + $0x28] sm:$0xf]
        %v1229 = vld [vmem:[%s1217 + $0x2c] sm:$0xf]
        %v1230 = vld [vmem:[%s1217 + $0x30] sm:$0xf]
        %v1231 = vld [vmem:[%s1217 + $0x34] sm:$0xf]
        %v1232 = vld [vmem:[%s1217 + $0x38] sm:$0xf]
        %v1233 = vld [vmem:[%s1217 + $0x3c] sm:$0xf]
        %v1244 = vunpack.c.l.b16 %v1207
        %v1245 = vunpack.c.l.b16 %v1208
        %v1246 = vunpack.c.l.b16 %v1209
        %v1247 = vunpack.c.l.b16 %v1210
        %v1248 = vunpack.c.l.b16 %v1211
        %v1249 = vunpack.c.l.b16 %v1212
        %v1250 = vunpack.c.l.b16 %v1213
        %v1251 = vunpack.c.l.b16 %v1214
        %v1252 = vunpack.c.l.b16 %v1215
        %v1253 = vunpack.c.l.b16 %v1216
        %v1254 = vpack.c.b16 %v1245, %v1244
        %v1255 = vpack.c.b16 %v1247, %v1246
        %v1256 = vpack.c.b16 %v1249, %v1248
        %v1257 = vpack.c.b16 %v1251, %v1250
        %v1258 = vpack.c.b16 %v1253, %v1252
        %v1260 = vshrl.u32 %v1254, 16
        %v1262 = vshll.u32 %v1254, 16
        %v1264 = vrot.slane %v1262, 1
        %v1265 = vor.u32 %v1260, %v1264
        %v1267 = vshll.u32 %v1255, 16
        %v1269 = vrot.slane %v1267, 1
        %v1270 = vsel %vm665, %v1265, %v1269
        %v1271 = vshrl.u32 %v1255, 16
        %v1273 = vor.u32 %v1271, %v1269
        %v1275 = vshll.u32 %v1256, 16
        %v1277 = vrot.slane %v1275, 1
        %v1278 = vsel %vm665, %v1273, %v1277
        %v1279 = vshrl.u32 %v1256, 16
        %v1281 = vor.u32 %v1279, %v1277
        %v1283 = vshll.u32 %v1257, 16
        %v1285 = vrot.slane %v1283, 1
        %v1286 = vsel %vm665, %v1281, %v1285
        %v1287 = vshrl.u32 %v1257, 16
        %v1289 = vor.u32 %v1287, %v1285
        %v1291 = vshll.u32 %v1258, 16
        %v1293 = vrot.slane %v1291, 1
        %v1294 = vsel %vm665, %v1289, %v1293
        %v1295 = vshrl.u32 %v1258, 16
        %v1297 = vor.u32 %v1295, %v1293
        %v1319 = vunpack.c.l.b16 %v1218
        %v1320 = vunpack.c.l.b16 %v1219
        %v1321 = vunpack.c.l.b16 %v1220
        %v1322 = vunpack.c.l.b16 %v1221
        %v1323 = vunpack.c.l.b16 %v1222
        %v1324 = vunpack.c.l.b16 %v1223
        %v1325 = vunpack.c.l.b16 %v1224
        %v1326 = vunpack.c.l.b16 %v1225
        %v1327 = vunpack.c.l.b16 %v1226
        %v1328 = vunpack.c.l.b16 %v1227
        %v1329 = vunpack.c.l.b16 %v1228
        %v1330 = vunpack.c.l.b16 %v1229
        %v1331 = vunpack.c.l.b16 %v1230
        %v1332 = vunpack.c.l.b16 %v1231
        %v1333 = vunpack.c.l.b16 %v1232
        %v1334 = vunpack.c.l.b16 %v1233
        %v1335 = vpack.c.b16 %v1320, %v1319
        %v1336 = vpack.c.b16 %v1322, %v1321
        %v1337 = vpack.c.b16 %v1324, %v1323
        %v1338 = vpack.c.b16 %v1326, %v1325
        %v1339 = vpack.c.b16 %v1328, %v1327
        %v1340 = vpack.c.b16 %v1330, %v1329
        %v1341 = vpack.c.b16 %v1332, %v1331
        %v1342 = vpack.c.b16 %v1334, %v1333
        %1351 = vmatprep.subr.bf16.mxu0 0
        %1352 = vmatpush1.bf16.msra.mxu0 %v1335
        %1353 = vmatprep.subr.bf16.mxu0 0
        %1354 = vmatpush1.bf16.msra.mxu0 %v1336
        %1355 = vmatprep.subr.bf16.mxu0 0
        %1356 = vmatpush1.bf16.msra.mxu0 %v1337
        %1357 = vmatprep.subr.bf16.mxu0 0
        %1358 = vmatpush1.bf16.msra.mxu0 %v1338
        %1359 = vmatprep.subr.bf16.mxu0 0
        %1360 = vmatpush1.bf16.msra.mxu0 %v1339
        %1361 = vmatprep.subr.bf16.mxu0 0
        %1362 = vmatpush1.bf16.msra.mxu0 %v1340
        %1363 = vmatprep.subr.bf16.mxu0 0
        %1364 = vmatpush1.bf16.msra.mxu0 %v1341
        %1365 = vmatprep.subr.bf16.mxu0 0
        %1366 = vmatpush1.bf16.msra.mxu0 %v1342
        %1367 = vmatprep.subr.bf16.mxu0 0
        %1368 = vmatpush1.bf16.msra.mxu0 0
        %1369 = vmatprep.subr.bf16.mxu0 0
        %1370 = vmatpush1.bf16.msra.mxu0 0
        %1371 = vmatprep.subr.bf16.mxu0 0
        %1372 = vmatpush1.bf16.msra.mxu0 0
        %1373 = vmatprep.subr.bf16.mxu0 0
        %1374 = vmatpush1.bf16.msra.mxu0 0
        %1375 = vmatprep.subr.bf16.mxu0 0
        %1376 = vmatpush1.bf16.msra.mxu0 0
        %1377 = vmatprep.subr.bf16.mxu0 0
        %1378 = vmatpush1.bf16.msra.mxu0 0
        %1379 = vmatprep.subr.bf16.mxu0 0
        %1380 = vmatpush1.bf16.msra.mxu0 0
        %1381 = vmatprep.subr.bf16.mxu0 0
        %1382 = vmatpush1.bf16.msra.mxu0 0
        %1383 = vmatprep.mubr.bf16.mxu0 0
        %1384 = vmatmul.mubr.bf16.gmra.mrb[0].mxu0 %v1270
        %v1385 = vpop.f32.mrb[0].mxu0
        %v1386 = vadd.f32 0.0, %v1385
        %v1387 = vpop.f32.mrb[0].mxu0
        %v1388 = vpop.f32.mrb[0].mxu0
        %v1389 = vadd.f32 0.0, %v1388
        %v1390 = vpop.f32.mrb[0].mxu0
        %1391 = vmatprep.mubr.bf16.mxu0 0
        %1392 = vmatmul.mubr.bf16.gmra.mrb[0].mxu0 %v1278
        %v1393 = vpop.f32.mrb[0].mxu0
        %v1394 = vadd.f32 0.0, %v1393
        %v1395 = vpop.f32.mrb[0].mxu0
        %v1396 = vpop.f32.mrb[0].mxu0
        %v1397 = vadd.f32 0.0, %v1396
        %v1398 = vpop.f32.mrb[0].mxu0
        %1399 = vmatprep.mubr.bf16.mxu0 0
        %1400 = vmatmul.mubr.bf16.gmra.mrb[0].mxu0 %v1286
        %v1401 = vpop.f32.mrb[0].mxu0
        %v1402 = vadd.f32 0.0, %v1401
        %v1403 = vpop.f32.mrb[0].mxu0
        %v1404 = vpop.f32.mrb[0].mxu0
        %v1405 = vadd.f32 0.0, %v1404
        %v1406 = vpop.f32.mrb[0].mxu0
        %1407 = vmatprep.mubr.bf16.mxu0 0
        %1408 = vmatmul.mubr.bf16.gmra.mrb[0].mxu0 %v1294
        %v1409 = vpop.f32.mrb[0].mxu0
        %v1410 = vadd.f32 0.0, %v1409
        %v1411 = vpop.f32.mrb[0].mxu0
        %v1412 = vpop.f32.mrb[0].mxu0
        %v1413 = vadd.f32 0.0, %v1412
        %v1414 = vpop.f32.mrb[0].mxu0
        %1415 = vmatprep.mubr.bf16.mxu0 0
        %1416 = vmatmul.mubr.bf16.gmra.mrb[0].mxu0 %v1297
        %v1417 = vpop.f32.mrb[0].mxu0
        %v1418 = vadd.f32 0.0, %v1417
        %v1419 = vpop.f32.mrb[0].mxu0
        %v1420 = vpop.f32.mrb[0].mxu0
        %v1421 = vpop.f32.mrb[0].mxu0
        %1422 = vdwg.mxu0
        %v1423 = vadd.f32 %v1198, %v1386
        %v1424 = vadd.f32 %v1199, %v1389
        %v1425 = vadd.f32 %v1200, %v1394
        %v1426 = vadd.f32 %v1201, %v1397
        %v1427 = vadd.f32 %v1202, %v1402
        %v1428 = vadd.f32 %v1203, %v1405
        %v1429 = vadd.f32 %v1204, %v1410
        %v1430 = vadd.f32 %v1205, %v1413
        %v1431 = vadd.f32 %v1206, %v1418
        %v1432 = vld [vmem:[%s231 + $0x4] sm:$0xf]
        %v1433 = vld [vmem:[%s231 + $0x8] sm:$0xf]
        %v1434 = vld [vmem:[%s231 + $0xc] sm:$0xf]
        %v1435 = vld [vmem:[%s231 + $0x10] sm:$0xf]
        %v1436 = vld [vmem:[%s231 + $0x14] sm:$0xf]
        %v1437 = vld [vmem:[%s231 + $0x18] sm:$0xf]
        %v1438 = vld [vmem:[%s231 + $0x1c] sm:$0xf]
        %v1439 = vld [vmem:[%s231 + $0x20] sm:$0xf]
        %v1440 = vld [vmem:[%s231 + $0x24] sm:$0xf]
        %v1441 = vld [vmem:[%s231 + $0x28] sm:$0x1]
        %s1442 = scalar_lea.vmem [#allocation5], 384
        %v1443 = vld [vmem:[%s1442] sm:$0xf]
        %v1444 = vld [vmem:[%s1442 + $0x4] sm:$0xf]
        %v1445 = vld [vmem:[%s1442 + $0x8] sm:$0xf]
        %v1446 = vld [vmem:[%s1442 + $0xc] sm:$0xf]
        %v1447 = vld [vmem:[%s1442 + $0x10] sm:$0xf]
        %v1448 = vld [vmem:[%s1442 + $0x14] sm:$0xf]
        %v1449 = vld [vmem:[%s1442 + $0x18] sm:$0xf]
        %v1450 = vld [vmem:[%s1442 + $0x1c] sm:$0xf]
        %v1451 = vld [vmem:[%s1442 + $0x20] sm:$0xf]
        %v1452 = vld [vmem:[%s1442 + $0x24] sm:$0xf]
        %v1453 = vld [vmem:[%s1442 + $0x28] sm:$0xf]
        %v1454 = vld [vmem:[%s1442 + $0x2c] sm:$0xf]
        %v1455 = vld [vmem:[%s1442 + $0x30] sm:$0xf]
        %v1456 = vld [vmem:[%s1442 + $0x34] sm:$0xf]
        %v1457 = vld [vmem:[%s1442 + $0x38] sm:$0xf]
        %v1458 = vld [vmem:[%s1442 + $0x3c] sm:$0xf]
        %v1469 = vunpack.c.l.b16 %v1432
        %v1470 = vunpack.c.l.b16 %v1433
        %v1471 = vunpack.c.l.b16 %v1434
        %v1472 = vunpack.c.l.b16 %v1435
        %v1473 = vunpack.c.l.b16 %v1436
        %v1474 = vunpack.c.l.b16 %v1437
        %v1475 = vunpack.c.l.b16 %v1438
        %v1476 = vunpack.c.l.b16 %v1439
        %v1477 = vunpack.c.l.b16 %v1440
        %v1478 = vunpack.c.l.b16 %v1441
        %v1479 = vpack.c.b16 %v1470, %v1469
        %v1480 = vpack.c.b16 %v1472, %v1471
        %v1481 = vpack.c.b16 %v1474, %v1473
        %v1482 = vpack.c.b16 %v1476, %v1475
        %v1483 = vpack.c.b16 %v1478, %v1477
        %v1485 = vshrl.u32 %v1479, 16
        %v1487 = vshll.u32 %v1479, 16
        %v1489 = vrot.slane %v1487, 1
        %v1490 = vor.u32 %v1485, %v1489
        %v1492 = vshll.u32 %v1480, 16
        %v1494 = vrot.slane %v1492, 1
        %v1495 = vsel %vm665, %v1490, %v1494
        %v1496 = vshrl.u32 %v1480, 16
        %v1498 = vor.u32 %v1496, %v1494
        %v1500 = vshll.u32 %v1481, 16
        %v1502 = vrot.slane %v1500, 1
        %v1503 = vsel %vm665, %v1498, %v1502
        %v1504 = vshrl.u32 %v1481, 16
        %v1506 = vor.u32 %v1504, %v1502
        %v1508 = vshll.u32 %v1482, 16
        %v1510 = vrot.slane %v1508, 1
        %v1511 = vsel %vm665, %v1506, %v1510
        %v1512 = vshrl.u32 %v1482, 16
        %v1514 = vor.u32 %v1512, %v1510
        %v1516 = vshll.u32 %v1483, 16
        %v1518 = vrot.slane %v1516, 1
        %v1519 = vsel %vm665, %v1514, %v1518
        %v1520 = vshrl.u32 %v1483, 16
        %v1522 = vor.u32 %v1520, %v1518
        %v1544 = vunpack.c.l.b16 %v1443
        %v1545 = vunpack.c.l.b16 %v1444
        %v1546 = vunpack.c.l.b16 %v1445
        %v1547 = vunpack.c.l.b16 %v1446
        %v1548 = vunpack.c.l.b16 %v1447
        %v1549 = vunpack.c.l.b16 %v1448
        %v1550 = vunpack.c.l.b16 %v1449
        %v1551 = vunpack.c.l.b16 %v1450
        %v1552 = vunpack.c.l.b16 %v1451
        %v1553 = vunpack.c.l.b16 %v1452
        %v1554 = vunpack.c.l.b16 %v1453
        %v1555 = vunpack.c.l.b16 %v1454
        %v1556 = vunpack.c.l.b16 %v1455
        %v1557 = vunpack.c.l.b16 %v1456
        %v1558 = vunpack.c.l.b16 %v1457
        %v1559 = vunpack.c.l.b16 %v1458
        %v1560 = vpack.c.b16 %v1545, %v1544
        %v1561 = vpack.c.b16 %v1547, %v1546
        %v1562 = vpack.c.b16 %v1549, %v1548
        %v1563 = vpack.c.b16 %v1551, %v1550
        %v1564 = vpack.c.b16 %v1553, %v1552
        %v1565 = vpack.c.b16 %v1555, %v1554
        %v1566 = vpack.c.b16 %v1557, %v1556
        %v1567 = vpack.c.b16 %v1559, %v1558
        %1576 = vmatprep.subr.bf16.mxu0 0
        %1577 = vmatpush1.bf16.msra.mxu0 %v1560
        %1578 = vmatprep.subr.bf16.mxu0 0
        %1579 = vmatpush1.bf16.msra.mxu0 %v1561
        %1580 = vmatprep.subr.bf16.mxu0 0
        %1581 = vmatpush1.bf16.msra.mxu0 %v1562
        %1582 = vmatprep.subr.bf16.mxu0 0
        %1583 = vmatpush1.bf16.msra.mxu0 %v1563
        %1584 = vmatprep.subr.bf16.mxu0 0
        %1585 = vmatpush1.bf16.msra.mxu0 %v1564
        %1586 = vmatprep.subr.bf16.mxu0 0
        %1587 = vmatpush1.bf16.msra.mxu0 %v1565
        %1588 = vmatprep.subr.bf16.mxu0 0
        %1589 = vmatpush1.bf16.msra.mxu0 %v1566
        %1590 = vmatprep.subr.bf16.mxu0 0
        %1591 = vmatpush1.bf16.msra.mxu0 %v1567
        %1592 = vmatprep.subr.bf16.mxu0 0
        %1593 = vmatpush1.bf16.msra.mxu0 0
        %1594 = vmatprep.subr.bf16.mxu0 0
        %1595 = vmatpush1.bf16.msra.mxu0 0
        %1596 = vmatprep.subr.bf16.mxu0 0
        %1597 = vmatpush1.bf16.msra.mxu0 0
        %1598 = vmatprep.subr.bf16.mxu0 0
        %1599 = vmatpush1.bf16.msra.mxu0 0
        %1600 = vmatprep.subr.bf16.mxu0 0
        %1601 = vmatpush1.bf16.msra.mxu0 0
        %1602 = vmatprep.subr.bf16.mxu0 0
        %1603 = vmatpush1.bf16.msra.mxu0 0
        %1604 = vmatprep.subr.bf16.mxu0 0
        %1605 = vmatpush1.bf16.msra.mxu0 0
        %1606 = vmatprep.subr.bf16.mxu0 0
        %1607 = vmatpush1.bf16.msra.mxu0 0
        %1608 = vmatprep.mubr.bf16.mxu0 0
        %1609 = vmatmul.mubr.bf16.gmra.mrb[0].mxu0 %v1495
        %v1610 = vpop.f32.mrb[0].mxu0
        %v1611 = vadd.f32 0.0, %v1610
        %v1612 = vpop.f32.mrb[0].mxu0
        %v1613 = vpop.f32.mrb[0].mxu0
        %v1614 = vadd.f32 0.0, %v1613
        %v1615 = vpop.f32.mrb[0].mxu0
        %1616 = vmatprep.mubr.bf16.mxu0 0
        %1617 = vmatmul.mubr.bf16.gmra.mrb[0].mxu0 %v1503
        %v1618 = vpop.f32.mrb[0].mxu0
        %v1619 = vadd.f32 0.0, %v1618
        %v1620 = vpop.f32.mrb[0].mxu0
        %v1621 = vpop.f32.mrb[0].mxu0
        %v1622 = vadd.f32 0.0, %v1621
        %v1623 = vpop.f32.mrb[0].mxu0
        %1624 = vmatprep.mubr.bf16.mxu0 0
        %1625 = vmatmul.mubr.bf16.gmra.mrb[0].mxu0 %v1511
        %v1626 = vpop.f32.mrb[0].mxu0
        %v1627 = vadd.f32 0.0, %v1626
        %v1628 = vpop.f32.mrb[0].mxu0
        %v1629 = vpop.f32.mrb[0].mxu0
        %v1630 = vadd.f32 0.0, %v1629
        %v1631 = vpop.f32.mrb[0].mxu0
        %1632 = vmatprep.mubr.bf16.mxu0 0
        %1633 = vmatmul.mubr.bf16.gmra.mrb[0].mxu0 %v1519
        %v1634 = vpop.f32.mrb[0].mxu0
        %v1635 = vadd.f32 0.0, %v1634
        %v1636 = vpop.f32.mrb[0].mxu0
        %v1637 = vpop.f32.mrb[0].mxu0
        %v1638 = vadd.f32 0.0, %v1637
        %v1639 = vpop.f32.mrb[0].mxu0
        %1640 = vmatprep.mubr.bf16.mxu0 0
        %1641 = vmatmul.mubr.bf16.gmra.mrb[0].mxu0 %v1522
        %v1642 = vpop.f32.mrb[0].mxu0
        %v1643 = vadd.f32 0.0, %v1642
        %v1644 = vpop.f32.mrb[0].mxu0
        %v1645 = vpop.f32.mrb[0].mxu0
        %v1646 = vpop.f32.mrb[0].mxu0
        %1647 = vdwg.mxu0
        %v1648 = vadd.f32 %v1423, %v1611
        %v1649 = vadd.f32 %v1424, %v1614
        %v1650 = vadd.f32 %v1425, %v1619
        %v1651 = vadd.f32 %v1426, %v1622
        %v1652 = vadd.f32 %v1427, %v1627
        %v1653 = vadd.f32 %v1428, %v1630
        %v1654 = vadd.f32 %v1429, %v1635
        %v1655 = vadd.f32 %v1430, %v1638
        %v1656 = vadd.f32 %v1431, %v1643
        %v1657 = vld [vmem:[%s290 + $0x4] sm:$0xf]
        %v1658 = vld [vmem:[%s290 + $0x8] sm:$0xf]
        %v1659 = vld [vmem:[%s290 + $0xc] sm:$0xf]
        %v1660 = vld [vmem:[%s290 + $0x10] sm:$0xf]
        %v1661 = vld [vmem:[%s290 + $0x14] sm:$0xf]
        %v1662 = vld [vmem:[%s290 + $0x18] sm:$0xf]
        %v1663 = vld [vmem:[%s290 + $0x1c] sm:$0xf]
        %v1664 = vld [vmem:[%s290 + $0x20] sm:$0xf]
        %v1665 = vld [vmem:[%s290 + $0x24] sm:$0xf]
        %v1666 = vld [vmem:[%s290 + $0x28] sm:$0x1]
        %s1667 = scalar_lea.vmem [#allocation5], 448
        %v1668 = vld [vmem:[%s1667] sm:$0xf]
        %v1669 = vld [vmem:[%s1667 + $0x4] sm:$0xf]
        %v1670 = vld [vmem:[%s1667 + $0x8] sm:$0xf]
        %v1671 = vld [vmem:[%s1667 + $0xc] sm:$0xf]
        %v1672 = vld [vmem:[%s1667 + $0x10] sm:$0xf]
        %v1673 = vld [vmem:[%s1667 + $0x14] sm:$0xf]
        %v1674 = vld [vmem:[%s1667 + $0x18] sm:$0xf]
        %v1675 = vld [vmem:[%s1667 + $0x1c] sm:$0xf]
        %v1676 = vld [vmem:[%s1667 + $0x20] sm:$0xf]
        %v1677 = vld [vmem:[%s1667 + $0x24] sm:$0xf]
        %v1678 = vld [vmem:[%s1667 + $0x28] sm:$0xf]
        %v1679 = vld [vmem:[%s1667 + $0x2c] sm:$0xf]
        %v1680 = vld [vmem:[%s1667 + $0x30] sm:$0xf]
        %v1681 = vld [vmem:[%s1667 + $0x34] sm:$0xf]
        %v1682 = vld [vmem:[%s1667 + $0x38] sm:$0xf]
        %v1683 = vld [vmem:[%s1667 + $0x3c] sm:$0xf]
        %v1694 = vunpack.c.l.b16 %v1657
        %v1695 = vunpack.c.l.b16 %v1658
        %v1696 = vunpack.c.l.b16 %v1659
        %v1697 = vunpack.c.l.b16 %v1660
        %v1698 = vunpack.c.l.b16 %v1661
        %v1699 = vunpack.c.l.b16 %v1662
        %v1700 = vunpack.c.l.b16 %v1663
        %v1701 = vunpack.c.l.b16 %v1664
        %v1702 = vunpack.c.l.b16 %v1665
        %v1703 = vunpack.c.l.b16 %v1666
        %v1704 = vpack.c.b16 %v1695, %v1694
        %v1705 = vpack.c.b16 %v1697, %v1696
        %v1706 = vpack.c.b16 %v1699, %v1698
        %v1707 = vpack.c.b16 %v1701, %v1700
        %v1708 = vpack.c.b16 %v1703, %v1702
        %v1710 = vshrl.u32 %v1704, 16
        %v1712 = vshll.u32 %v1704, 16
        %v1714 = vrot.slane %v1712, 1
        %v1715 = vor.u32 %v1710, %v1714
        %v1717 = vshll.u32 %v1705, 16
        %v1719 = vrot.slane %v1717, 1
        %v1720 = vsel %vm665, %v1715, %v1719
        %v1721 = vshrl.u32 %v1705, 16
        %v1723 = vor.u32 %v1721, %v1719
        %v1725 = vshll.u32 %v1706, 16
        %v1727 = vrot.slane %v1725, 1
        %v1728 = vsel %vm665, %v1723, %v1727
        %v1729 = vshrl.u32 %v1706, 16
        %v1731 = vor.u32 %v1729, %v1727
        %v1733 = vshll.u32 %v1707, 16
        %v1735 = vrot.slane %v1733, 1
        %v1736 = vsel %vm665, %v1731, %v1735
        %v1737 = vshrl.u32 %v1707, 16
        %v1739 = vor.u32 %v1737, %v1735
        %v1741 = vshll.u32 %v1708, 16
        %v1743 = vrot.slane %v1741, 1
        %v1744 = vsel %vm665, %v1739, %v1743
        %v1745 = vshrl.u32 %v1708, 16
        %v1747 = vor.u32 %v1745, %v1743
        %v1769 = vunpack.c.l.b16 %v1668
        %v1770 = vunpack.c.l.b16 %v1669
        %v1771 = vunpack.c.l.b16 %v1670
        %v1772 = vunpack.c.l.b16 %v1671
        %v1773 = vunpack.c.l.b16 %v1672
        %v1774 = vunpack.c.l.b16 %v1673
        %v1775 = vunpack.c.l.b16 %v1674
        %v1776 = vunpack.c.l.b16 %v1675
        %v1777 = vunpack.c.l.b16 %v1676
        %v1778 = vunpack.c.l.b16 %v1677
        %v1779 = vunpack.c.l.b16 %v1678
        %v1780 = vunpack.c.l.b16 %v1679
        %v1781 = vunpack.c.l.b16 %v1680
        %v1782 = vunpack.c.l.b16 %v1681
        %v1783 = vunpack.c.l.b16 %v1682
        %v1784 = vunpack.c.l.b16 %v1683
        %v1785 = vpack.c.b16 %v1770, %v1769
        %v1786 = vpack.c.b16 %v1772, %v1771
        %v1787 = vpack.c.b16 %v1774, %v1773
        %v1788 = vpack.c.b16 %v1776, %v1775
        %v1789 = vpack.c.b16 %v1778, %v1777
        %v1790 = vpack.c.b16 %v1780, %v1779
        %v1791 = vpack.c.b16 %v1782, %v1781
        %v1792 = vpack.c.b16 %v1784, %v1783
        %1801 = vmatprep.subr.bf16.mxu0 0
        %1802 = vmatpush1.bf16.msra.mxu0 %v1785
        %1803 = vmatprep.subr.bf16.mxu0 0
        %1804 = vmatpush1.bf16.msra.mxu0 %v1786
        %1805 = vmatprep.subr.bf16.mxu0 0
        %1806 = vmatpush1.bf16.msra.mxu0 %v1787
        %1807 = vmatprep.subr.bf16.mxu0 0
        %1808 = vmatpush1.bf16.msra.mxu0 %v1788
        %1809 = vmatprep.subr.bf16.mxu0 0
        %1810 = vmatpush1.bf16.msra.mxu0 %v1789
        %1811 = vmatprep.subr.bf16.mxu0 0
        %1812 = vmatpush1.bf16.msra.mxu0 %v1790
        %1813 = vmatprep.subr.bf16.mxu0 0
        %1814 = vmatpush1.bf16.msra.mxu0 %v1791
        %1815 = vmatprep.subr.bf16.mxu0 0
        %1816 = vmatpush1.bf16.msra.mxu0 %v1792
        %1817 = vmatprep.subr.bf16.mxu0 0
        %1818 = vmatpush1.bf16.msra.mxu0 0
        %1819 = vmatprep.subr.bf16.mxu0 0
        %1820 = vmatpush1.bf16.msra.mxu0 0
        %1821 = vmatprep.subr.bf16.mxu0 0
        %1822 = vmatpush1.bf16.msra.mxu0 0
        %1823 = vmatprep.subr.bf16.mxu0 0
        %1824 = vmatpush1.bf16.msra.mxu0 0
        %1825 = vmatprep.subr.bf16.mxu0 0
        %1826 = vmatpush1.bf16.msra.mxu0 0
        %1827 = vmatprep.subr.bf16.mxu0 0
        %1828 = vmatpush1.bf16.msra.mxu0 0
        %1829 = vmatprep.subr.bf16.mxu0 0
        %1830 = vmatpush1.bf16.msra.mxu0 0
        %1831 = vmatprep.subr.bf16.mxu0 0
        %1832 = vmatpush1.bf16.msra.mxu0 0
        %1833 = vmatprep.mubr.bf16.mxu0 0
        %1834 = vmatmul.mubr.bf16.gmra.mrb[0].mxu0 %v1720
        %v1835 = vpop.f32.mrb[0].mxu0
        %v1836 = vadd.f32 0.0, %v1835
        %v1837 = vpop.f32.mrb[0].mxu0
        %v1838 = vpop.f32.mrb[0].mxu0
        %v1839 = vadd.f32 0.0, %v1838
        %v1840 = vpop.f32.mrb[0].mxu0
        %1841 = vmatprep.mubr.bf16.mxu0 0
        %1842 = vmatmul.mubr.bf16.gmra.mrb[0].mxu0 %v1728
        %v1843 = vpop.f32.mrb[0].mxu0
        %v1844 = vadd.f32 0.0, %v1843
        %v1845 = vpop.f32.mrb[0].mxu0
        %v1846 = vpop.f32.mrb[0].mxu0
        %v1847 = vadd.f32 0.0, %v1846
        %v1848 = vpop.f32.mrb[0].mxu0
        %1849 = vmatprep.mubr.bf16.mxu0 0
        %1850 = vmatmul.mubr.bf16.gmra.mrb[0].mxu0 %v1736
        %v1851 = vpop.f32.mrb[0].mxu0
        %v1852 = vadd.f32 0.0, %v1851
        %v1853 = vpop.f32.mrb[0].mxu0
        %v1854 = vpop.f32.mrb[0].mxu0
        %v1855 = vadd.f32 0.0, %v1854
        %v1856 = vpop.f32.mrb[0].mxu0
        %1857 = vmatprep.mubr.bf16.mxu0 0
        %1858 = vmatmul.mubr.bf16.gmra.mrb[0].mxu0 %v1744
        %v1859 = vpop.f32.mrb[0].mxu0
        %v1860 = vadd.f32 0.0, %v1859
        %v1861 = vpop.f32.mrb[0].mxu0
        %v1862 = vpop.f32.mrb[0].mxu0
        %v1863 = vadd.f32 0.0, %v1862
        %v1864 = vpop.f32.mrb[0].mxu0
        %1865 = vmatprep.mubr.bf16.mxu0 0
        %1866 = vmatmul.mubr.bf16.gmra.mrb[0].mxu0 %v1747
        %v1867 = vpop.f32.mrb[0].mxu0
        %v1868 = vadd.f32 0.0, %v1867
        %v1869 = vpop.f32.mrb[0].mxu0
        %v1870 = vpop.f32.mrb[0].mxu0
        %v1871 = vpop.f32.mrb[0].mxu0
        %1872 = vdwg.mxu0
        %v1873 = vadd.f32 %v1648, %v1836
        %v1874 = vadd.f32 %v1649, %v1839
        %v1875 = vadd.f32 %v1650, %v1844
        %v1876 = vadd.f32 %v1651, %v1847
        %v1877 = vadd.f32 %v1652, %v1852
        %v1878 = vadd.f32 %v1653, %v1855
        %v1879 = vadd.f32 %v1654, %v1860
        %v1880 = vadd.f32 %v1655, %v1863
        %v1881 = vadd.f32 %v1656, %v1868
        %v1882 = vld [vmem:[%s231 + $0x4] sm:$0xe]
        %s1883 = scalar_lea.vmem [#allocation5], 512
        %v1884 = vld [vmem:[%s1883] sm:$0xf]
        %v1885 = vld [vmem:[%s1883 + $0x4] sm:$0xf]
        %v1886 = vld [vmem:[%s1883 + $0x8] sm:$0xf]
        %v1887 = vld [vmem:[%s1883 + $0xc] sm:$0xf]
        %v1888 = vld [vmem:[%s1883 + $0x10] sm:$0xf]
        %v1889 = vld [vmem:[%s1883 + $0x14] sm:$0xf]
        %v1890 = vld [vmem:[%s1883 + $0x18] sm:$0xf]
        %v1891 = vld [vmem:[%s1883 + $0x1c] sm:$0xf]
        %v1892 = vld [vmem:[%s1883 + $0x20] sm:$0xf]
        %v1893 = vld [vmem:[%s1883 + $0x24] sm:$0xf]
        %v1894 = vld [vmem:[%s1883 + $0x28] sm:$0xf]
        %v1895 = vld [vmem:[%s1883 + $0x2c] sm:$0xf]
        %v1896 = vld [vmem:[%s1883 + $0x30] sm:$0xf]
        %v1897 = vld [vmem:[%s1883 + $0x34] sm:$0xf]
        %v1898 = vld [vmem:[%s1883 + $0x38] sm:$0xf]
        %v1899 = vld [vmem:[%s1883 + $0x3c] sm:$0xf]
        %v1901 = vunpack.c.l.b16 %v1882
        %v1902 = vpack.c.b16 %v1470, %v1901
        %vm1903 = vcmask 1046528
        %v1904 = vrot.slane %v1902, 1
        %v1905 = vrot.slane %v1480, 1
        %v1906 = vsel %vm1903, %v1904, %v1905
        %v1907 = vrot.slane %v1481, 1
        %v1908 = vsel %vm1903, %v1905, %v1907
        %v1909 = vrot.slane %v1482, 1
        %v1910 = vsel %vm1903, %v1907, %v1909
        %v1911 = vrot.slane %v1483, 1
        %v1912 = vsel %vm1903, %v1909, %v1911
        %v1934 = vunpack.c.l.b16 %v1884
        %v1935 = vunpack.c.l.b16 %v1885
        %v1936 = vunpack.c.l.b16 %v1886
        %v1937 = vunpack.c.l.b16 %v1887
        %v1938 = vunpack.c.l.b16 %v1888
        %v1939 = vunpack.c.l.b16 %v1889
        %v1940 = vunpack.c.l.b16 %v1890
        %v1941 = vunpack.c.l.b16 %v1891
        %v1942 = vunpack.c.l.b16 %v1892
        %v1943 = vunpack.c.l.b16 %v1893
        %v1944 = vunpack.c.l.b16 %v1894
        %v1945 = vunpack.c.l.b16 %v1895
        %v1946 = vunpack.c.l.b16 %v1896
        %v1947 = vunpack.c.l.b16 %v1897
        %v1948 = vunpack.c.l.b16 %v1898
        %v1949 = vunpack.c.l.b16 %v1899
        %v1950 = vpack.c.b16 %v1935, %v1934
        %v1951 = vpack.c.b16 %v1937, %v1936
        %v1952 = vpack.c.b16 %v1939, %v1938
        %v1953 = vpack.c.b16 %v1941, %v1940
        %v1954 = vpack.c.b16 %v1943, %v1942
        %v1955 = vpack.c.b16 %v1945, %v1944
        %v1956 = vpack.c.b16 %v1947, %v1946
        %v1957 = vpack.c.b16 %v1949, %v1948
        %1966 = vmatprep.subr.bf16.mxu0 0
        %1967 = vmatpush1.bf16.msra.mxu0 %v1950
        %1968 = vmatprep.subr.bf16.mxu0 0
        %1969 = vmatpush1.bf16.msra.mxu0 %v1951
        %1970 = vmatprep.subr.bf16.mxu0 0
        %1971 = vmatpush1.bf16.msra.mxu0 %v1952
        %1972 = vmatprep.subr.bf16.mxu0 0
        %1973 = vmatpush1.bf16.msra.mxu0 %v1953
        %1974 = vmatprep.subr.bf16.mxu0 0
        %1975 = vmatpush1.bf16.msra.mxu0 %v1954
        %1976 = vmatprep.subr.bf16.mxu0 0
        %1977 = vmatpush1.bf16.msra.mxu0 %v1955
        %1978 = vmatprep.subr.bf16.mxu0 0
        %1979 = vmatpush1.bf16.msra.mxu0 %v1956
        %1980 = vmatprep.subr.bf16.mxu0 0
        %1981 = vmatpush1.bf16.msra.mxu0 %v1957
        %1982 = vmatprep.subr.bf16.mxu0 0
        %1983 = vmatpush1.bf16.msra.mxu0 0
        %1984 = vmatprep.subr.bf16.mxu0 0
        %1985 = vmatpush1.bf16.msra.mxu0 0
        %1986 = vmatprep.subr.bf16.mxu0 0
        %1987 = vmatpush1.bf16.msra.mxu0 0
        %1988 = vmatprep.subr.bf16.mxu0 0
        %1989 = vmatpush1.bf16.msra.mxu0 0
        %1990 = vmatprep.subr.bf16.mxu0 0
        %1991 = vmatpush1.bf16.msra.mxu0 0
        %1992 = vmatprep.subr.bf16.mxu0 0
        %1993 = vmatpush1.bf16.msra.mxu0 0
        %1994 = vmatprep.subr.bf16.mxu0 0
        %1995 = vmatpush1.bf16.msra.mxu0 0
        %1996 = vmatprep.subr.bf16.mxu0 0
        %1997 = vmatpush1.bf16.msra.mxu0 0
        %1998 = vmatprep.mubr.bf16.mxu0 0
        %1999 = vmatmul.mubr.bf16.gmra.mrb[0].mxu0 %v1906
        %v2000 = vpop.f32.mrb[0].mxu0
        %v2001 = vadd.f32 0.0, %v2000
        %v2002 = vpop.f32.mrb[0].mxu0
        %v2003 = vpop.f32.mrb[0].mxu0
        %v2004 = vadd.f32 0.0, %v2003
        %v2005 = vpop.f32.mrb[0].mxu0
        %2006 = vmatprep.mubr.bf16.mxu0 0
        %2007 = vmatmul.mubr.bf16.gmra.mrb[0].mxu0 %v1908
        %v2008 = vpop.f32.mrb[0].mxu0
        %v2009 = vadd.f32 0.0, %v2008
        %v2010 = vpop.f32.mrb[0].mxu0
        %v2011 = vpop.f32.mrb[0].mxu0
        %v2012 = vadd.f32 0.0, %v2011
        %v2013 = vpop.f32.mrb[0].mxu0
        %2014 = vmatprep.mubr.bf16.mxu0 0
        %2015 = vmatmul.mubr.bf16.gmra.mrb[0].mxu0 %v1910
        %v2016 = vpop.f32.mrb[0].mxu0
        %v2017 = vadd.f32 0.0, %v2016
        %v2018 = vpop.f32.mrb[0].mxu0
        %v2019 = vpop.f32.mrb[0].mxu0
        %v2020 = vadd.f32 0.0, %v2019
        %v2021 = vpop.f32.mrb[0].mxu0
        %2022 = vmatprep.mubr.bf16.mxu0 0
        %2023 = vmatmul.mubr.bf16.gmra.mrb[0].mxu0 %v1912
        %v2024 = vpop.f32.mrb[0].mxu0
        %v2025 = vadd.f32 0.0, %v2024
        %v2026 = vpop.f32.mrb[0].mxu0
        %v2027 = vpop.f32.mrb[0].mxu0
        %v2028 = vadd.f32 0.0, %v2027
        %v2029 = vpop.f32.mrb[0].mxu0
        %2030 = vmatprep.mubr.bf16.mxu0 0
        %2031 = vmatmul.mubr.bf16.gmra.mrb[0].mxu0 %v1911
        %v2032 = vpop.f32.mrb[0].mxu0
        %v2033 = vadd.f32 0.0, %v2032
        %v2034 = vpop.f32.mrb[0].mxu0
        %v2035 = vpop.f32.mrb[0].mxu0
        %v2036 = vpop.f32.mrb[0].mxu0
        %2037 = vdwg.mxu0
        %v2038 = vadd.f32 %v1873, %v2001
        %v2039 = vadd.f32 %v1874, %v2004
        %v2040 = vadd.f32 %v1875, %v2009
        %v2041 = vadd.f32 %v1876, %v2012
        %v2042 = vadd.f32 %v1877, %v2017
        %v2043 = vadd.f32 %v1878, %v2020
        %v2044 = vadd.f32 %v1879, %v2025
        %v2045 = vadd.f32 %v1880, %v2028
        %v2046 = vadd.f32 %v1881, %v2033
        %v2047 = vld [vmem:[%s263] sm:$0x1]
        %v2049 = vlaneseq
        %v2050 = vshrl.u32 %v2049, 7
        %v2051 = vsub.s32 0, %v2050
        %v2052 = vrot.slane %v2047, %v2051
        %v2054 = vadd.f32 %v2038, %v2052
        %v2055 = vadd.f32 %v2039, %v2052
        %v2056 = vadd.f32 %v2040, %v2052
        %v2057 = vadd.f32 %v2041, %v2052
        %v2058 = vadd.f32 %v2042, %v2052
        %v2059 = vadd.f32 %v2043, %v2052
        %v2060 = vadd.f32 %v2044, %v2052
        %v2061 = vadd.f32 %v2045, %v2052
        %v2062 = vadd.f32 %v2046, %v2052
        %v2063 = vmax.f32 %v2054, 0.0
        %v2064 = vmax.f32 %v2055, 0.0
        %v2065 = vmax.f32 %v2056, 0.0
        %v2066 = vmax.f32 %v2057, 0.0
        %v2067 = vmax.f32 %v2058, 0.0
        %v2068 = vmax.f32 %v2059, 0.0
        %v2069 = vmax.f32 %v2060, 0.0
        %v2070 = vmax.f32 %v2061, 0.0
        %v2071 = vmax.f32 %v2062, 0.0
        %v2072 = vpack.c.bf16 %v2064, %v2063
        %v2073 = vpack.c.bf16 %v2066, %v2065
        %v2074 = vpack.c.bf16 %v2068, %v2067
        %v2075 = vpack.c.bf16 %v2070, %v2069
        %v2076 = vpack.c.bf16 %v2071, %v2071
        %v2082 = vunpack.c.l.b16 %v2072
        %v2083 = vunpack.c.h.b16 %v2072
        %v2084 = vunpack.c.l.b16 %v2073
        %v2085 = vunpack.c.h.b16 %v2073
        %v2086 = vunpack.c.l.b16 %v2074
        %v2087 = vunpack.c.h.b16 %v2074
        %v2088 = vunpack.c.l.b16 %v2075
        %v2089 = vunpack.c.h.b16 %v2075
        %v2090 = vunpack.c.l.b16 %v2076
        %v2091 = vpack.c.b16 %v2082, %v2082
        %v2092 = vpack.c.b16 %v2083, %v2083
        %v2093 = vpack.c.b16 %v2084, %v2084
        %v2094 = vpack.c.b16 %v2085, %v2085
        %v2095 = vpack.c.b16 %v2086, %v2086
        %v2096 = vpack.c.b16 %v2087, %v2087
        %v2097 = vpack.c.b16 %v2088, %v2088
        %v2098 = vpack.c.b16 %v2089, %v2089
        %v2099 = vpack.c.b16 %v2090, %v2090
        %2109 = vst [vmem:[%s260] sm:$0xf] %v2091
        %2110 = vst [vmem:[%s260 + $0x4] sm:$0xf] %v2092
        %2111 = vst [vmem:[%s260 + $0x8] sm:$0xf] %v2093
        %2112 = vst [vmem:[%s260 + $0xc] sm:$0xf] %v2094
        %2113 = vst [vmem:[%s260 + $0x10] sm:$0xf] %v2095
        %2114 = vst [vmem:[%s260 + $0x14] sm:$0xf] %v2096
        %2115 = vst [vmem:[%s260 + $0x18] sm:$0xf] %v2097
        %2116 = vst [vmem:[%s260 + $0x1c] sm:$0xf] %v2098
        %2117 = vst [vmem:[%s260 + $0x20] sm:$0xf] %v2099
        %s2118 = sand.u32 %s121, 1
        %s2119 = scalar_lea.sflag [#allocation4], %s2118
        %s2120 = sand.u32 %s121, 1
        %s2121 = smul.addr %s2120, 36
        %s2122 = scalar_lea.vmem [#allocation7], %s2121
        // Predicated region
        $region41: #{tpu_custom_call.1} parent=31 // pred_check
          %p2123 = pneg %p131
        $region42: #{tpu_custom_call.1} parent=31 // pred_check_branch
          %2125 = sbr.rel (%p2123) target = $region44
        $region43: #{tpu_custom_call.1} parent=31 // pred_region
          %s2127 = ssub.s32 576, 576
          %2128 = vsyncadd %s2119, %s2127
          %s2129 = smul.addr %s25, 9
          %s2130 = sadd.s32 %s26, %s2129
          %s2131 = smul.addr %s2130, 64
          %s2132 = scalar_lea.hbm %s3, %s2131
          %s2133 = sshll.u32 %s2122, 4
          %s2134 = int_to_ptr.vmem [resolvable:$true] %s2133
          %2139 = dma.vmem_to_hbm [thread:$0]  %s2134, 576, %s2132, %s2119, 64, 64, 4
        $region44: #{tpu_custom_call.1} parent=31 // pred_fallthru
          _
      $region32: #{tpu_custom_call.1} parent=5 // pred_fallthru
        _
      %p2140 = scmp.le.s32.totalorder 2, %s16
      // Predicated region
      $region45: #{tpu_custom_call.1} parent=5 // pred_check
        %p2141 = pneg %p2140
      $region46: #{tpu_custom_call.1} parent=5 // pred_check_branch
        %2143 = sbr.rel (%p2141) target = $region48
      $region47: #{tpu_custom_call.1} parent=5 // pred_region
        %s2144 = ssub.s32 %s16, 2
        // Predicated region
        $region49: #{tpu_custom_call.1} parent=47 // pred_check
          %p2145 = pneg %p137
        $region50: #{tpu_custom_call.1} parent=47 // pred_check_branch
          %2147 = sbr.rel (%p2145) target = $region52
        $region51: #{tpu_custom_call.1} parent=47 // pred_region
          %s2148 = sand.u32 %s122, 1
          %s2149 = scalar_lea.sflag [#allocation4], %s2148
          %s2150 = sand.u32 %s122, 1
          %s2151 = smul.addr %s2150, 36
          %s2152 = scalar_lea.vmem [#allocation7], %s2151
          %2153 = dma.done %s2149, 576
        $region52: #{tpu_custom_call.1} parent=47 // pred_fallthru
          _
      $region48: #{tpu_custom_call.1} parent=5 // pred_fallthru
        _
    $region6: #{tpu_custom_call.1} parent=1 // loop_footer
      %s20 = sadd.s32 1, %s16
    $region7: #{tpu_custom_call.1} parent=1 // loop_footer_branch
      %15 = sbr.rel target = $region3
    $region8: #{tpu_custom_call.1} parent=1 // loop_exit
      _
    %2154 = vsyncpa [#allocation3], 1
    %s2155 = scalar_lea.sflag [#allocation3], 1
    %2156 = vsyncpa %s2155, 1
    %2157 = vsyncpa [#allocation6], 1
    %2158 = vsyncpa [#allocation4], 1
    %s2159 = scalar_lea.sflag [#allocation4], 1
    %2160 = vsyncpa %s2159, 1

</llo_original>
